<compile_context>
chip_gen: v7x
topology: tpu7x:2x2x1
jax: 0.10.0
libtpu: 0.0.40
codegen_flags: <defaults>
</compile_context>

<pallas_src>
import math
import functools

import jax
import jax.numpy as jnp
from jax.experimental import pallas as pl
from jax.experimental.pallas import tpu as pltpu


_CONTRACT_LAST = (((1,), (1,)), ((), ()))   # a[l,d] x b[m,d] -> [l,m]


def _layer_norm(h, g, b, eps=1e-5):
    mu = jnp.mean(h, axis=-1, keepdims=True)
    var = jnp.mean((h - mu) ** 2, axis=-1, keepdims=True)   # biased var (PyTorch LayerNorm)
    return (h - mu) * jax.lax.rsqrt(var + eps) * g + b


# --------------------------------- the kernel --------------------------------

def encoder_layer_kernel(n_heads, num_relations,
                         x_ref, rel_ref, relk_ref, relv_ref,
                         wqkv_ref, bqkv_ref, wo_ref, bo_ref,
                         g1_ref, be1_ref, w1_ref, b1_ref, w2_ref, b2_ref,
                         g2_ref, be2_ref,
                         o_ref, qkv_sc, qr_sc, attn_sc):
    Bt, L, D = x_ref.shape
    H = n_heads
    Hd = D // H
    R = num_relations
    rows = Bt * L

    xf = x_ref[...].reshape(rows, D)                         # f32 [rows, D]

    # Fused QKV matmul (bf16 operands, f32 accumulation).  The 1/sqrt(Hd)
    # attention scale is folded into the Q columns of wqkv/bqkv in the wrapper.
    qkv = jnp.dot(xf.astype(jnp.bfloat16), wqkv_ref[...],
                  preferred_element_type=jnp.float32) + bqkv_ref[...]
    qkv16 = qkv.astype(jnp.bfloat16)                         # only the bf16 copy stays live
    qkv_sc[...] = qkv16

    # Relation-key scores for every head at once: q @ blockdiag(relk^T) -> [rows, H*R].
    qr_sc[...] = jnp.dot(qkv16[:, 0:D], relk_ref[...],
                         preferred_element_type=jnp.float32)

    wo16 = wo_ref[...]                                       # [D, D]  bf16
    relv16 = relv_ref[...]                                   # [R, Hd] bf16

    def attend(b, carry):
        idx = pl.multiple_of(b * L, L)
        rel_b = rel_ref[b]                                   # [L, L] int32
        q_b = qkv_sc[pl.ds(idx, L), 0:D]
        k_b = qkv_sc[pl.ds(idx, L), D:2 * D]
        v_b = qkv_sc[pl.ds(idx, L), 2 * D:3 * D]
        qr_b = qr_sc[pl.ds(idx, L), :]                       # [L, H*R] f32

        acc = jnp.zeros((L, D), jnp.float32)                 # per-sequence attn output
        for h in range(H):                                   # small head count, static unroll
            qh = q_b[:, h * Hd:(h + 1) * Hd]
            kh = k_b[:, h * Hd:(h + 1) * Hd]
            vh = v_b[:, h * Hd:(h + 1) * Hd]

            scores = jax.lax.dot_general(qh, kh, _CONTRACT_LAST,
                                         preferred_element_type=jnp.float32)  # [L, L]
            qr_h = qr_b[:, h * R:(h + 1) * R]                # [L, R] f32
            # relation-key term: rel_term[i,j] = qr_h[i, rel[i,j]] (0 for out-of-range ids)
            rel_term = jnp.zeros((L, L), jnp.float32)
            for r in range(R):                               # cheap VPU selects, no f32 one-hots
                rel_term = jnp.where(rel_b == r, qr_h[:, r:r + 1], rel_term)
            scores = scores + rel_term
            # TODO(synk): attn_mask / key_padding_mask not supported (forward default is None).

            m = jnp.max(scores, axis=-1, keepdims=True)
            p = jnp.exp(scores - m)
            inv = pl.reciprocal(jnp.sum(p, axis=-1, keepdims=True), approx=True)
            attn = p * inv                                   # [L, L] f32
            attn16 = attn.astype(jnp.bfloat16)               # cast once per head

            oh = jnp.dot(attn16, vh, preferred_element_type=jnp.float32)       # [L, Hd]
            # relation-value term: per-relation attention mass (XLU row sums), then one
            # small [L,R]x[R,Hd] matmul instead of R rank-1 [L,L] matmuls.
            w = jnp.concatenate(
                [jnp.sum(jnp.where(rel_b == r, attn, 0.0), axis=-1, keepdims=True)
                 for r in range(R)], axis=-1)                                   # [L, R]
            oh = oh + jnp.dot(w.astype(jnp.bfloat16), relv16,
                              preferred_element_type=jnp.float32)

            # per-head output projection, accumulated through the MXU (no lane concat)
            acc = acc + jnp.dot(oh.astype(jnp.bfloat16),
                                wo16[h * Hd:(h + 1) * Hd, :],
                                preferred_element_type=jnp.float32)
        attn_sc[pl.ds(idx, L), :] = acc
        return carry

    jax.lax.fori_loop(0, Bt, attend, 0)

    attn_out = attn_sc[...] + bo_ref[...]                    # [rows, D]
    # attention / output dropout p = 0.0 -> identity

    # ---- residual + layernorm ----
    h1 = _layer_norm(xf + attn_out, g1_ref[...], be1_ref[...])

    # ---- FFN: Linear(D,2D) -> GELU -> Linear(2D,D) -> Dropout(0.0) ----
    f = jnp.dot(h1.astype(jnp.bfloat16), w1_ref[...],
                preferred_element_type=jnp.float32) + b1_ref[...]
    f = jax.nn.gelu(f, approximate=True)                     # tanh GELU (EUP)
    f = jnp.dot(f.astype(jnp.bfloat16), w2_ref[...],
                preferred_element_type=jnp.float32) + b2_ref[...]

    # ---- residual + layernorm ----
    out = _layer_norm(h1 + f, g2_ref[...], be2_ref[...])
    # TODO(synk): for D < 128 the (Bt, L, D) store is lane-masked; a lane-dense
    # (Bt, L*D) layout needs a lane-splitting relayout Mosaic reshape may reject.
    o_ref[...] = out.reshape(Bt, L, D).astype(o_ref.dtype)


# --------------------------------- wrapper ------------------------------------

def _pick_batch_block(B, L, target_rows=512):
    """Batch elements per grid step.

    Targets ~512 flattened rows per step (fills the 2x256x256 MXU on v6e/v7x and
    amortizes per-step overhead) while guaranteeing >= 2 grid steps whenever
    B >= 2 so both v7x TensorCores get work and DMAs overlap compute.
    """
    cap = B // 2 if B >= 2 else 1
    bt = max(1, min(cap, max(1, target_rows // max(L, 1))))
    while B % bt:
        bt -= 1
    return max(bt, 1)


def _vmem_limit_bytes(bt, L, D, H, R, param_bytes):
    """Explicit double-buffer accounting, capped well below v7x's 64 MiB."""
    rows = bt * L
    block_io = 2 * (4 * bt * L * D + 4 * bt * L * L + 4 * bt * L * D)   # 2x (x, rel, out) blocks
    scratch = rows * (2 * 3 * D) + rows * 4 * (H * R) + rows * 4 * D    # qkv bf16, qr f32, attn f32
    live = 4 * rows * (3 * D + 2 * D + 2 * D + 2 * D) + 16 * 4 * L * L  # qkv f32, h1, ffn, out, scores
    need = 2 * param_bytes + block_io + scratch + live
    return int(min(48 * 2 ** 20, max(16 * 2 ** 20, 2 * need)))


def transformer_encoder_layer(x, graph_relations, params, n_heads, num_relations):
    B, L, D = x.shape
    (relk, relv, wq, bq, wk, bk, wv, bv, wo, bo,
     g1, be1, w1, b1, w2, b2, g2, be2) = params

    H = n_heads
    Hd = D // H
    R = num_relations
    scale = 1.0 / math.sqrt(Hd)

    # fuse Q/K/V and fold the attention scale into the Q columns
    wqkv = jnp.concatenate([wq * scale, wk, wv], axis=1).astype(jnp.bfloat16)  # [D, 3D]
    bqkv = jnp.concatenate([bq * scale, bk, bv], axis=1)                       # [1, 3D] f32

    # block-diagonal relation-key projection: head h rows hold relk^T -> one matmul per block
    relk_exp = jnp.zeros((D, H * R), jnp.float32)
    for h in range(H):
        relk_exp = relk_exp.at[h * Hd:(h + 1) * Hd, h * R:(h + 1) * R].set(relk.T)
    relk_exp = relk_exp.astype(jnp.bfloat16)

    relv16 = relv.astype(jnp.bfloat16)
    wo16 = wo.astype(jnp.bfloat16)
    w116 = w1.astype(jnp.bfloat16)
    w216 = w2.astype(jnp.bfloat16)

    rel_ids = graph_relations.astype(jnp.int32)              # [B, L, L] int32

    bt = _pick_batch_block(B, L)
    kparams = (relk_exp, relv16, wqkv, bqkv, wo16, bo,
               g1, be1, w116, b1, w216, b2, g2, be2)

    kernel = functools.partial(encoder_layer_kernel, n_heads, num_relations)

    def batched(shape):
        nd = len(shape)
        blk = (bt,) + tuple(shape[1:])
        return pl.BlockSpec(blk, lambda i, _nd=nd: (i,) + (0,) * (_nd - 1))

    def whole(shape):
        nd = len(shape)
        return pl.BlockSpec(tuple(shape), lambda i, _nd=nd: (0,) * _nd)

    in_specs = [batched(x.shape), batched(rel_ids.shape)]
    in_specs += [whole(p.shape) for p in kparams]
    out_specs = pl.BlockSpec((bt, L, D), lambda i: (i, 0, 0))

    param_bytes = sum(int(p.size) * p.dtype.itemsize for p in kparams)
    vmem_limit = _vmem_limit_bytes(bt, L, D, H, R, param_bytes)

    flops = int(
        2 * B * L * D * (3 * D)          # fused QKV
        + 2 * B * L * D * (H * R)        # relation-key scores (block-diagonal)
        + 2 * B * H * L * L * (2 * Hd)   # scores + attn @ V
        + 2 * B * H * L * R * Hd         # relation-value matmul
        + 2 * B * L * D * D              # output projection
        + 2 * B * L * D * (2 * D) * 2)   # FFN
    transcendentals = int(B * H * L * L + 2 * B * L * D)     # softmax exp + GELU tanh
    bytes_accessed = int(2 * 4 * B * L * D + 4 * B * L * L + param_bytes)

    return pl.pallas_call(
        kernel,
        out_shape=jax.ShapeDtypeStruct((B, L, D), x.dtype),
        grid=(B // bt,),
        in_specs=in_specs,
        out_specs=out_specs,
        scratch_shapes=[
            pltpu.VMEM((bt * L, 3 * D), jnp.bfloat16),        # fused QKV (bf16)
            pltpu.VMEM((bt * L, H * R), jnp.float32),         # relation-key scores
            pltpu.VMEM((bt * L, D), jnp.float32),             # attention output
        ],
        compiler_params=pltpu.CompilerParams(
            dimension_semantics=("parallel",),
            vmem_limit_bytes=vmem_limit),
        cost_estimate=pl.CostEstimate(flops=flops,
                                      transcendentals=transcendentals,
                                      bytes_accessed=bytes_accessed),
    )(x, rel_ids, *kparams)


# ---------------------------- deterministic params ----------------------------

def _linear(key, fin, fout):
    kw, kb = jax.random.split(key)
    bound = 1.0 / math.sqrt(fin)          # PyTorch nn.Linear default init range
    w = jax.random.uniform(kw, (fin, fout), jnp.float32, -bound, bound)
    b = jax.random.uniform(kb, (1, fout), jnp.float32, -bound, bound)
    return w, b


def init_params(key, D, H, R):
    ks = jax.random.split(key, 8)
    wq, bq = _linear(ks[0], D, D)
    wk, bk = _linear(ks[1], D, D)
    wv, bv = _linear(ks[2], D, D)
    wo, bo = _linear(ks[3], D, D)
    w1, b1 = _linear(ks[4], D, 2 * D)
    w2, b2 = _linear(ks[5], 2 * D, D)
    Hd = D // H
    relk = jax.random.normal(ks[6], (R, Hd), jnp.float32)   # relation key embeddings
    relv = jax.random.normal(ks[7], (R, Hd), jnp.float32)   # relation value embeddings
    g1 = jnp.ones((1, D), jnp.float32)
    be1 = jnp.zeros((1, D), jnp.float32)
    g2 = jnp.ones((1, D), jnp.float32)
    be2 = jnp.zeros((1, D), jnp.float32)
    return (relk, relv, wq, bq, wk, bk, wv, bv, wo, bo,
            g1, be1, w1, b1, w2, b2, g2, be2)


# ------------------------------------ main ------------------------------------

if __name__ == "__main__":
    B, L, D, H, R = 2, 8, 32, 4, 3   # batch, seq, embed_dim, n_heads, num_relations

    key = jax.random.PRNGKey(0)
    k_x, k_rel, k_p = jax.random.split(key, 3)
    x = jax.random.normal(k_x, (B, L, D), jnp.float32)
    graph_relations = jax.random.randint(k_rel, (B, L, L), 0, R)
    params = init_params(k_p, D, H, R)

    out = transformer_encoder_layer(x, graph_relations, params, H, R)
    out = jax.block_until_ready(out)
    assert out.shape == (B, L, D) and out.dtype == jnp.float32
    assert bool(jnp.all(jnp.isfinite(out)))
    print("KERNEL_OK")
</pallas_src>

<mosaic_0001>
module attributes {stable_mosaic.version = 11 : i64} {
  func.func @encoder_layer_kernel(%arg0: i32, %arg1: memref<1x8x32xf32, #tpu.memory_space<vmem>>, %arg2: memref<1x8x8xi32, #tpu.memory_space<vmem>>, %arg3: memref<32x12xbf16, #tpu.memory_space<vmem>>, %arg4: memref<3x8xbf16, #tpu.memory_space<vmem>>, %arg5: memref<32x96xbf16, #tpu.memory_space<vmem>>, %arg6: memref<1x96xf32, #tpu.memory_space<vmem>>, %arg7: memref<32x32xbf16, #tpu.memory_space<vmem>>, %arg8: memref<1x32xf32, #tpu.memory_space<vmem>>, %arg9: memref<1x32xf32, #tpu.memory_space<vmem>>, %arg10: memref<1x32xf32, #tpu.memory_space<vmem>>, %arg11: memref<32x64xbf16, #tpu.memory_space<vmem>>, %arg12: memref<1x64xf32, #tpu.memory_space<vmem>>, %arg13: memref<64x32xbf16, #tpu.memory_space<vmem>>, %arg14: memref<1x32xf32, #tpu.memory_space<vmem>>, %arg15: memref<1x32xf32, #tpu.memory_space<vmem>>, %arg16: memref<1x32xf32, #tpu.memory_space<vmem>>, %arg17: memref<1x8x32xf32, #tpu.memory_space<vmem>>, %arg18: memref<8x96xbf16, #tpu.memory_space<vmem>>, %arg19: memref<8x12xf32, #tpu.memory_space<vmem>>, %arg20: memref<8x32xf32, #tpu.memory_space<vmem>>) attributes {dimension_semantics = [#tpu.dimension_semantics<parallel>], iteration_bounds = array<i64: 2>, scalar_prefetch = 0 : i64, scratch_operands = 3 : i64, tpu.core_type = #tpu.core_type<tc>, window_params = [{transform_indices = @transform_0, window_bounds = array<i64: 1, 8, 32>}, {transform_indices = @transform_1, window_bounds = array<i64: 1, 8, 8>}, {pipeline_mode = #tpu.pipeline_mode<synchronous>, transform_indices = @transform_2, window_bounds = array<i64: 32, 12>}, {pipeline_mode = #tpu.pipeline_mode<synchronous>, transform_indices = @transform_3, window_bounds = array<i64: 3, 8>}, {pipeline_mode = #tpu.pipeline_mode<synchronous>, transform_indices = @transform_4, window_bounds = array<i64: 32, 96>}, {pipeline_mode = #tpu.pipeline_mode<synchronous>, transform_indices = @transform_5, window_bounds = array<i64: 1, 96>}, {pipeline_mode = #tpu.pipeline_mode<synchronous>, transform_indices = @transform_6, window_bounds = array<i64: 32, 32>}, {pipeline_mode = #tpu.pipeline_mode<synchronous>, transform_indices = @transform_7, window_bounds = array<i64: 1, 32>}, {pipeline_mode = #tpu.pipeline_mode<synchronous>, transform_indices = @transform_8, window_bounds = array<i64: 1, 32>}, {pipeline_mode = #tpu.pipeline_mode<synchronous>, transform_indices = @transform_9, window_bounds = array<i64: 1, 32>}, {pipeline_mode = #tpu.pipeline_mode<synchronous>, transform_indices = @transform_10, window_bounds = array<i64: 32, 64>}, {pipeline_mode = #tpu.pipeline_mode<synchronous>, transform_indices = @transform_11, window_bounds = array<i64: 1, 64>}, {pipeline_mode = #tpu.pipeline_mode<synchronous>, transform_indices = @transform_12, window_bounds = array<i64: 64, 32>}, {pipeline_mode = #tpu.pipeline_mode<synchronous>, transform_indices = @transform_13, window_bounds = array<i64: 1, 32>}, {pipeline_mode = #tpu.pipeline_mode<synchronous>, transform_indices = @transform_14, window_bounds = array<i64: 1, 32>}, {pipeline_mode = #tpu.pipeline_mode<synchronous>, transform_indices = @transform_15, window_bounds = array<i64: 1, 32>}, {transform_indices = @transform_16, window_bounds = array<i64: 1, 8, 32>}]} {
    %c0 = arith.constant 0 : index
    %c0_0 = arith.constant 0 : index
    %c0_1 = arith.constant 0 : index
    %0 = vector.load %arg1[%c0, %c0_0, %c0_1] : memref<1x8x32xf32, #tpu.memory_space<vmem>>, vector<1x8x32xf32>
    %1 = vector.shape_cast %0 : vector<1x8x32xf32> to vector<8x32xf32>
    %2 = arith.truncf %1 : vector<8x32xf32> to vector<8x32xbf16>
    %c0_2 = arith.constant 0 : index
    %c0_3 = arith.constant 0 : index
    %3 = vector.load %arg5[%c0_2, %c0_3] : memref<32x96xbf16, #tpu.memory_space<vmem>>, vector<32x96xbf16>
    %cst = arith.constant dense<0.000000e+00> : vector<8x96xf32>
    %4 = tpu.matmul %2, %3, %cst {dimension_numbers = #tpu.dot_dimension_numbers<[1], [0], [0], [1], [0, 0, 1, 1], [], []>} : vector<8x32xbf16>, vector<32x96xbf16>, vector<8x96xf32> -> vector<8x96xf32>
    %c0_4 = arith.constant 0 : index
    %c0_5 = arith.constant 0 : index
    %5 = vector.load %arg6[%c0_4, %c0_5] : memref<1x96xf32, #tpu.memory_space<vmem>>, vector<1x96xf32>
    %6 = vector.broadcast %5 : vector<1x96xf32> to vector<8x96xf32>
    %7 = arith.addf %4, %6 : vector<8x96xf32>
    %8 = arith.truncf %7 : vector<8x96xf32> to vector<8x96xbf16>
    %c0_6 = arith.constant 0 : index
    %c0_7 = arith.constant 0 : index
    %9 = vector.load %arg18[%c0_6, %c0_7] : memref<8x96xbf16, #tpu.memory_space<vmem>>, vector<8x96xbf16>
    tpu.vector_store %arg18[%c0_6, %c0_7], %8 {strides = array<i32>} : memref<8x96xbf16, #tpu.memory_space<vmem>>, vector<8x96xbf16>,
    %10 = vector.extract_strided_slice %8 {offsets = [0, 0], sizes = [8, 32], strides = [1, 1]} : vector<8x96xbf16> to vector<8x32xbf16>
    %c0_8 = arith.constant 0 : index
    %c0_9 = arith.constant 0 : index
    %11 = vector.load %arg3[%c0_8, %c0_9] : memref<32x12xbf16, #tpu.memory_space<vmem>>, vector<32x12xbf16>
    %cst_10 = arith.constant dense<0.000000e+00> : vector<8x12xf32>
    %12 = tpu.matmul %10, %11, %cst_10 {dimension_numbers = #tpu.dot_dimension_numbers<[1], [0], [0], [1], [0, 0, 1, 1], [], []>} : vector<8x32xbf16>, vector<32x12xbf16>, vector<8x12xf32> -> vector<8x12xf32>
    %c0_11 = arith.constant 0 : index
    %c0_12 = arith.constant 0 : index
    %13 = vector.load %arg19[%c0_11, %c0_12] : memref<8x12xf32, #tpu.memory_space<vmem>>, vector<8x12xf32>
    tpu.vector_store %arg19[%c0_11, %c0_12], %12 {strides = array<i32>} : memref<8x12xf32, #tpu.memory_space<vmem>>, vector<8x12xf32>,
    %c0_13 = arith.constant 0 : index
    %c0_14 = arith.constant 0 : index
    %14 = vector.load %arg7[%c0_13, %c0_14] : memref<32x32xbf16, #tpu.memory_space<vmem>>, vector<32x32xbf16>
    %c0_15 = arith.constant 0 : index
    %c0_16 = arith.constant 0 : index
    %15 = vector.load %arg4[%c0_15, %c0_16] : memref<3x8xbf16, #tpu.memory_space<vmem>>, vector<3x8xbf16>
    %c0_i32 = arith.constant 0 : i32
    %c8_i32 = arith.constant 8 : i32
    %16 = arith.muli %c0_i32, %c8_i32 : i32
    %17 = tpu.assume_multiple %16, 8 : i32
    %18 = arith.index_cast %c0_i32 : i32 to index
    %c0_17 = arith.constant 0 : index
    %c0_18 = arith.constant 0 : index
    %19 = vector.load %arg2[%18, %c0_17, %c0_18] : memref<1x8x8xi32, #tpu.memory_space<vmem>>, vector<1x8x8xi32>
    %20 = vector.shape_cast %19 : vector<1x8x8xi32> to vector<8x8xi32>
    %21 = arith.index_cast %17 : i32 to index
    %c0_19 = arith.constant 0 : index
    %22 = vector.load %arg18[%21, %c0_19] : memref<8x96xbf16, #tpu.memory_space<vmem>>, vector<8x32xbf16>
    %23 = arith.index_cast %17 : i32 to index
    %c32 = arith.constant 32 : index
    %24 = vector.load %arg18[%23, %c32] : memref<8x96xbf16, #tpu.memory_space<vmem>>, vector<8x32xbf16>
    %25 = arith.index_cast %17 : i32 to index
    %c64 = arith.constant 64 : index
    %26 = vector.load %arg18[%25, %c64] : memref<8x96xbf16, #tpu.memory_space<vmem>>, vector<8x32xbf16>
    %27 = arith.index_cast %17 : i32 to index
    %c0_20 = arith.constant 0 : index
    %28 = vector.load %arg19[%27, %c0_20] : memref<8x12xf32, #tpu.memory_space<vmem>>, vector<8x12xf32>
    %cst_21 = arith.constant 0.000000e+00 : f32
    %29 = vector.broadcast %cst_21 : f32 to vector<8x32xf32>
    %30 = vector.extract_strided_slice %22 {offsets = [0, 0], sizes = [8, 8], strides = [1, 1]} : vector<8x32xbf16> to vector<8x8xbf16>
    %31 = vector.extract_strided_slice %24 {offsets = [0, 0], sizes = [8, 8], strides = [1, 1]} : vector<8x32xbf16> to vector<8x8xbf16>
    %32 = vector.extract_strided_slice %26 {offsets = [0, 0], sizes = [8, 8], strides = [1, 1]} : vector<8x32xbf16> to vector<8x8xbf16>
    %cst_22 = arith.constant dense<0.000000e+00> : vector<8x8xf32>
    %33 = tpu.matmul %30, %31, %cst_22 {dimension_numbers = #tpu.dot_dimension_numbers<[1], [1], [0], [0], [0, 0, 1, 0], [], []>} : vector<8x8xbf16>, vector<8x8xbf16>, vector<8x8xf32> -> vector<8x8xf32>
    %34 = vector.extract_strided_slice %28 {offsets = [0, 0], sizes = [8, 3], strides = [1, 1]} : vector<8x12xf32> to vector<8x3xf32>
    %cst_23 = arith.constant 0.000000e+00 : f32
    %35 = vector.broadcast %cst_23 : f32 to vector<8x8xf32>
    %c0_i32_24 = arith.constant 0 : i32
    %36 = vector.broadcast %c0_i32_24 : i32 to vector<8x8xi32>
    %37 = arith.cmpi eq, %20, %36 : vector<8x8xi32>
    %38 = vector.extract_strided_slice %34 {offsets = [0, 0], sizes = [8, 1], strides = [1, 1]} : vector<8x3xf32> to vector<8x1xf32>
    %39 = vector.shape_cast %38 : vector<8x1xf32> to vector<8x1xf32>
    %40 = vector.broadcast %39 : vector<8x1xf32> to vector<8x8xf32>
    %41 = arith.select %37, %40, %35 : vector<8x8xi1>, vector<8x8xf32>
    %c1_i32 = arith.constant 1 : i32
    %42 = vector.broadcast %c1_i32 : i32 to vector<8x8xi32>
    %43 = arith.cmpi eq, %20, %42 : vector<8x8xi32>
    %44 = vector.extract_strided_slice %34 {offsets = [0, 1], sizes = [8, 1], strides = [1, 1]} : vector<8x3xf32> to vector<8x1xf32>
    %45 = vector.shape_cast %44 : vector<8x1xf32> to vector<8x1xf32>
    %46 = vector.broadcast %45 : vector<8x1xf32> to vector<8x8xf32>
    %47 = arith.select %43, %46, %41 : vector<8x8xi1>, vector<8x8xf32>
    %c2_i32 = arith.constant 2 : i32
    %48 = vector.broadcast %c2_i32 : i32 to vector<8x8xi32>
    %49 = arith.cmpi eq, %20, %48 : vector<8x8xi32>
    %50 = vector.extract_strided_slice %34 {offsets = [0, 2], sizes = [8, 1], strides = [1, 1]} : vector<8x3xf32> to vector<8x1xf32>
    %51 = vector.shape_cast %50 : vector<8x1xf32> to vector<8x1xf32>
    %52 = vector.broadcast %51 : vector<8x1xf32> to vector<8x8xf32>
    %53 = arith.select %49, %52, %47 : vector<8x8xi1>, vector<8x8xf32>
    %54 = arith.addf %33, %53 : vector<8x8xf32>
    %cst_25 = arith.constant dense<0xFF800000> : vector<8xf32>
    %55 = vector.multi_reduction <maximumf>, %54, %cst_25 [1] : vector<8x8xf32> to vector<8xf32>
    %56 = vector.shape_cast %55 : vector<8xf32> to vector<8x1xf32>
    %57 = vector.broadcast %56 : vector<8x1xf32> to vector<8x8xf32>
    %58 = arith.subf %54, %57 : vector<8x8xf32>
    %59 = math.exp %58 : vector<8x8xf32>
    %cst_26 = arith.constant dense<0.000000e+00> : vector<8xf32>
    %60 = vector.multi_reduction <add>, %59, %cst_26 [1] : vector<8x8xf32> to vector<8xf32>
    %61 = vector.shape_cast %60 : vector<8xf32> to vector<8x1xf32>
    %62 = tpu.reciprocal %61 {approx = true} : vector<8x1xf32> -> vector<8x1xf32>
    %63 = vector.broadcast %62 : vector<8x1xf32> to vector<8x8xf32>
    %64 = arith.mulf %59, %63 : vector<8x8xf32>
    %65 = arith.truncf %64 : vector<8x8xf32> to vector<8x8xbf16>
    %cst_27 = arith.constant dense<0.000000e+00> : vector<8x8xf32>
    %66 = tpu.matmul %65, %32, %cst_27 {dimension_numbers = #tpu.dot_dimension_numbers<[1], [0], [0], [1], [0, 0, 1, 1], [], []>} : vector<8x8xbf16>, vector<8x8xbf16>, vector<8x8xf32> -> vector<8x8xf32>
    %c0_i32_28 = arith.constant 0 : i32
    %67 = vector.broadcast %c0_i32_28 : i32 to vector<8x8xi32>
    %68 = arith.cmpi eq, %20, %67 : vector<8x8xi32>
    %cst_29 = arith.constant 0.000000e+00 : f32
    %69 = vector.broadcast %cst_29 : f32 to vector<8x8xf32>
    %70 = arith.select %68, %64, %69 : vector<8x8xi1>, vector<8x8xf32>
    %cst_30 = arith.constant dense<0.000000e+00> : vector<8xf32>
    %71 = vector.multi_reduction <add>, %70, %cst_30 [1] : vector<8x8xf32> to vector<8xf32>
    %72 = vector.shape_cast %71 : vector<8xf32> to vector<8x1xf32>
    %c1_i32_31 = arith.constant 1 : i32
    %73 = vector.broadcast %c1_i32_31 : i32 to vector<8x8xi32>
    %74 = arith.cmpi eq, %20, %73 : vector<8x8xi32>
    %cst_32 = arith.constant 0.000000e+00 : f32
    %75 = vector.broadcast %cst_32 : f32 to vector<8x8xf32>
    %76 = arith.select %74, %64, %75 : vector<8x8xi1>, vector<8x8xf32>
    %cst_33 = arith.constant dense<0.000000e+00> : vector<8xf32>
    %77 = vector.multi_reduction <add>, %76, %cst_33 [1] : vector<8x8xf32> to vector<8xf32>
    %78 = vector.shape_cast %77 : vector<8xf32> to vector<8x1xf32>
    %c2_i32_34 = arith.constant 2 : i32
    %79 = vector.broadcast %c2_i32_34 : i32 to vector<8x8xi32>
    %80 = arith.cmpi eq, %20, %79 : vector<8x8xi32>
    %cst_35 = arith.constant 0.000000e+00 : f32
    %81 = vector.broadcast %cst_35 : f32 to vector<8x8xf32>
    %82 = arith.select %80, %64, %81 : vector<8x8xi1>, vector<8x8xf32>
    %cst_36 = arith.constant dense<0.000000e+00> : vector<8xf32>
    %83 = vector.multi_reduction <add>, %82, %cst_36 [1] : vector<8x8xf32> to vector<8xf32>
    %84 = vector.shape_cast %83 : vector<8xf32> to vector<8x1xf32>
    %85 = tpu.concatenate %72, %78, %84 in 1 : vector<8x1xf32>, vector<8x1xf32>, vector<8x1xf32> -> vector<8x3xf32>
    %86 = arith.truncf %85 : vector<8x3xf32> to vector<8x3xbf16>
    %cst_37 = arith.constant dense<0.000000e+00> : vector<8x8xf32>
    %87 = tpu.matmul %86, %15, %cst_37 {dimension_numbers = #tpu.dot_dimension_numbers<[1], [0], [0], [1], [0, 0, 1, 1], [], []>} : vector<8x3xbf16>, vector<3x8xbf16>, vector<8x8xf32> -> vector<8x8xf32>
    %88 = arith.addf %66, %87 : vector<8x8xf32>
    %89 = arith.truncf %88 : vector<8x8xf32> to vector<8x8xbf16>
    %90 = vector.extract_strided_slice %14 {offsets = [0, 0], sizes = [8, 32], strides = [1, 1]} : vector<32x32xbf16> to vector<8x32xbf16>
    %cst_38 = arith.constant dense<0.000000e+00> : vector<8x32xf32>
    %91 = tpu.matmul %89, %90, %cst_38 {dimension_numbers = #tpu.dot_dimension_numbers<[1], [0], [0], [1], [0, 0, 1, 1], [], []>} : vector<8x8xbf16>, vector<8x32xbf16>, vector<8x32xf32> -> vector<8x32xf32>
    %92 = arith.addf %29, %91 : vector<8x32xf32>
    %93 = vector.extract_strided_slice %22 {offsets = [0, 8], sizes = [8, 8], strides = [1, 1]} : vector<8x32xbf16> to vector<8x8xbf16>
    %94 = vector.extract_strided_slice %24 {offsets = [0, 8], sizes = [8, 8], strides = [1, 1]} : vector<8x32xbf16> to vector<8x8xbf16>
    %95 = vector.extract_strided_slice %26 {offsets = [0, 8], sizes = [8, 8], strides = [1, 1]} : vector<8x32xbf16> to vector<8x8xbf16>
    %cst_39 = arith.constant dense<0.000000e+00> : vector<8x8xf32>
    %96 = tpu.matmul %93, %94, %cst_39 {dimension_numbers = #tpu.dot_dimension_numbers<[1], [1], [0], [0], [0, 0, 1, 0], [], []>} : vector<8x8xbf16>, vector<8x8xbf16>, vector<8x8xf32> -> vector<8x8xf32>
    %97 = vector.extract_strided_slice %28 {offsets = [0, 3], sizes = [8, 3], strides = [1, 1]} : vector<8x12xf32> to vector<8x3xf32>
    %cst_40 = arith.constant 0.000000e+00 : f32
    %98 = vector.broadcast %cst_40 : f32 to vector<8x8xf32>
    %c0_i32_41 = arith.constant 0 : i32
    %99 = vector.broadcast %c0_i32_41 : i32 to vector<8x8xi32>
    %100 = arith.cmpi eq, %20, %99 : vector<8x8xi32>
    %101 = vector.extract_strided_slice %97 {offsets = [0, 0], sizes = [8, 1], strides = [1, 1]} : vector<8x3xf32> to vector<8x1xf32>
    %102 = vector.shape_cast %101 : vector<8x1xf32> to vector<8x1xf32>
    %103 = vector.broadcast %102 : vector<8x1xf32> to vector<8x8xf32>
    %104 = arith.select %100, %103, %98 : vector<8x8xi1>, vector<8x8xf32>
    %c1_i32_42 = arith.constant 1 : i32
    %105 = vector.broadcast %c1_i32_42 : i32 to vector<8x8xi32>
    %106 = arith.cmpi eq, %20, %105 : vector<8x8xi32>
    %107 = vector.extract_strided_slice %97 {offsets = [0, 1], sizes = [8, 1], strides = [1, 1]} : vector<8x3xf32> to vector<8x1xf32>
    %108 = vector.shape_cast %107 : vector<8x1xf32> to vector<8x1xf32>
    %109 = vector.broadcast %108 : vector<8x1xf32> to vector<8x8xf32>
    %110 = arith.select %106, %109, %104 : vector<8x8xi1>, vector<8x8xf32>
    %c2_i32_43 = arith.constant 2 : i32
    %111 = vector.broadcast %c2_i32_43 : i32 to vector<8x8xi32>
    %112 = arith.cmpi eq, %20, %111 : vector<8x8xi32>
    %113 = vector.extract_strided_slice %97 {offsets = [0, 2], sizes = [8, 1], strides = [1, 1]} : vector<8x3xf32> to vector<8x1xf32>
    %114 = vector.shape_cast %113 : vector<8x1xf32> to vector<8x1xf32>
    %115 = vector.broadcast %114 : vector<8x1xf32> to vector<8x8xf32>
    %116 = arith.select %112, %115, %110 : vector<8x8xi1>, vector<8x8xf32>
    %117 = arith.addf %96, %116 : vector<8x8xf32>
    %cst_44 = arith.constant dense<0xFF800000> : vector<8xf32>
    %118 = vector.multi_reduction <maximumf>, %117, %cst_44 [1] : vector<8x8xf32> to vector<8xf32>
    %119 = vector.shape_cast %118 : vector<8xf32> to vector<8x1xf32>
    %120 = vector.broadcast %119 : vector<8x1xf32> to vector<8x8xf32>
    %121 = arith.subf %117, %120 : vector<8x8xf32>
    %122 = math.exp %121 : vector<8x8xf32>
    %cst_45 = arith.constant dense<0.000000e+00> : vector<8xf32>
    %123 = vector.multi_reduction <add>, %122, %cst_45 [1] : vector<8x8xf32> to vector<8xf32>
    %124 = vector.shape_cast %123 : vector<8xf32> to vector<8x1xf32>
    %125 = tpu.reciprocal %124 {approx = true} : vector<8x1xf32> -> vector<8x1xf32>
    %126 = vector.broadcast %125 : vector<8x1xf32> to vector<8x8xf32>
    %127 = arith.mulf %122, %126 : vector<8x8xf32>
    %128 = arith.truncf %127 : vector<8x8xf32> to vector<8x8xbf16>
    %cst_46 = arith.constant dense<0.000000e+00> : vector<8x8xf32>
    %129 = tpu.matmul %128, %95, %cst_46 {dimension_numbers = #tpu.dot_dimension_numbers<[1], [0], [0], [1], [0, 0, 1, 1], [], []>} : vector<8x8xbf16>, vector<8x8xbf16>, vector<8x8xf32> -> vector<8x8xf32>
    %c0_i32_47 = arith.constant 0 : i32
    %130 = vector.broadcast %c0_i32_47 : i32 to vector<8x8xi32>
    %131 = arith.cmpi eq, %20, %130 : vector<8x8xi32>
    %cst_48 = arith.constant 0.000000e+00 : f32
    %132 = vector.broadcast %cst_48 : f32 to vector<8x8xf32>
    %133 = arith.select %131, %127, %132 : vector<8x8xi1>, vector<8x8xf32>
    %cst_49 = arith.constant dense<0.000000e+00> : vector<8xf32>
    %134 = vector.multi_reduction <add>, %133, %cst_49 [1] : vector<8x8xf32> to vector<8xf32>
    %135 = vector.shape_cast %134 : vector<8xf32> to vector<8x1xf32>
    %c1_i32_50 = arith.constant 1 : i32
    %136 = vector.broadcast %c1_i32_50 : i32 to vector<8x8xi32>
    %137 = arith.cmpi eq, %20, %136 : vector<8x8xi32>
    %cst_51 = arith.constant 0.000000e+00 : f32
    %138 = vector.broadcast %cst_51 : f32 to vector<8x8xf32>
    %139 = arith.select %137, %127, %138 : vector<8x8xi1>, vector<8x8xf32>
    %cst_52 = arith.constant dense<0.000000e+00> : vector<8xf32>
    %140 = vector.multi_reduction <add>, %139, %cst_52 [1] : vector<8x8xf32> to vector<8xf32>
    %141 = vector.shape_cast %140 : vector<8xf32> to vector<8x1xf32>
    %c2_i32_53 = arith.constant 2 : i32
    %142 = vector.broadcast %c2_i32_53 : i32 to vector<8x8xi32>
    %143 = arith.cmpi eq, %20, %142 : vector<8x8xi32>
    %cst_54 = arith.constant 0.000000e+00 : f32
    %144 = vector.broadcast %cst_54 : f32 to vector<8x8xf32>
    %145 = arith.select %143, %127, %144 : vector<8x8xi1>, vector<8x8xf32>
    %cst_55 = arith.constant dense<0.000000e+00> : vector<8xf32>
    %146 = vector.multi_reduction <add>, %145, %cst_55 [1] : vector<8x8xf32> to vector<8xf32>
    %147 = vector.shape_cast %146 : vector<8xf32> to vector<8x1xf32>
    %148 = tpu.concatenate %135, %141, %147 in 1 : vector<8x1xf32>, vector<8x1xf32>, vector<8x1xf32> -> vector<8x3xf32>
    %149 = arith.truncf %148 : vector<8x3xf32> to vector<8x3xbf16>
    %cst_56 = arith.constant dense<0.000000e+00> : vector<8x8xf32>
    %150 = tpu.matmul %149, %15, %cst_56 {dimension_numbers = #tpu.dot_dimension_numbers<[1], [0], [0], [1], [0, 0, 1, 1], [], []>} : vector<8x3xbf16>, vector<3x8xbf16>, vector<8x8xf32> -> vector<8x8xf32>
    %151 = arith.addf %129, %150 : vector<8x8xf32>
    %152 = arith.truncf %151 : vector<8x8xf32> to vector<8x8xbf16>
    %153 = vector.extract_strided_slice %14 {offsets = [8, 0], sizes = [8, 32], strides = [1, 1]} : vector<32x32xbf16> to vector<8x32xbf16>
    %cst_57 = arith.constant dense<0.000000e+00> : vector<8x32xf32>
    %154 = tpu.matmul %152, %153, %cst_57 {dimension_numbers = #tpu.dot_dimension_numbers<[1], [0], [0], [1], [0, 0, 1, 1], [], []>} : vector<8x8xbf16>, vector<8x32xbf16>, vector<8x32xf32> -> vector<8x32xf32>
    %155 = arith.addf %92, %154 : vector<8x32xf32>
    %156 = vector.extract_strided_slice %22 {offsets = [0, 16], sizes = [8, 8], strides = [1, 1]} : vector<8x32xbf16> to vector<8x8xbf16>
    %157 = vector.extract_strided_slice %24 {offsets = [0, 16], sizes = [8, 8], strides = [1, 1]} : vector<8x32xbf16> to vector<8x8xbf16>
    %158 = vector.extract_strided_slice %26 {offsets = [0, 16], sizes = [8, 8], strides = [1, 1]} : vector<8x32xbf16> to vector<8x8xbf16>
    %cst_58 = arith.constant dense<0.000000e+00> : vector<8x8xf32>
    %159 = tpu.matmul %156, %157, %cst_58 {dimension_numbers = #tpu.dot_dimension_numbers<[1], [1], [0], [0], [0, 0, 1, 0], [], []>} : vector<8x8xbf16>, vector<8x8xbf16>, vector<8x8xf32> -> vector<8x8xf32>
    %160 = vector.extract_strided_slice %28 {offsets = [0, 6], sizes = [8, 3], strides = [1, 1]} : vector<8x12xf32> to vector<8x3xf32>
    %cst_59 = arith.constant 0.000000e+00 : f32
    %161 = vector.broadcast %cst_59 : f32 to vector<8x8xf32>
    %c0_i32_60 = arith.constant 0 : i32
    %162 = vector.broadcast %c0_i32_60 : i32 to vector<8x8xi32>
    %163 = arith.cmpi eq, %20, %162 : vector<8x8xi32>
    %164 = vector.extract_strided_slice %160 {offsets = [0, 0], sizes = [8, 1], strides = [1, 1]} : vector<8x3xf32> to vector<8x1xf32>
    %165 = vector.shape_cast %164 : vector<8x1xf32> to vector<8x1xf32>
    %166 = vector.broadcast %165 : vector<8x1xf32> to vector<8x8xf32>
    %167 = arith.select %163, %166, %161 : vector<8x8xi1>, vector<8x8xf32>
    %c1_i32_61 = arith.constant 1 : i32
    %168 = vector.broadcast %c1_i32_61 : i32 to vector<8x8xi32>
    %169 = arith.cmpi eq, %20, %168 : vector<8x8xi32>
    %170 = vector.extract_strided_slice %160 {offsets = [0, 1], sizes = [8, 1], strides = [1, 1]} : vector<8x3xf32> to vector<8x1xf32>
    %171 = vector.shape_cast %170 : vector<8x1xf32> to vector<8x1xf32>
    %172 = vector.broadcast %171 : vector<8x1xf32> to vector<8x8xf32>
    %173 = arith.select %169, %172, %167 : vector<8x8xi1>, vector<8x8xf32>
    %c2_i32_62 = arith.constant 2 : i32
    %174 = vector.broadcast %c2_i32_62 : i32 to vector<8x8xi32>
    %175 = arith.cmpi eq, %20, %174 : vector<8x8xi32>
    %176 = vector.extract_strided_slice %160 {offsets = [0, 2], sizes = [8, 1], strides = [1, 1]} : vector<8x3xf32> to vector<8x1xf32>
    %177 = vector.shape_cast %176 : vector<8x1xf32> to vector<8x1xf32>
    %178 = vector.broadcast %177 : vector<8x1xf32> to vector<8x8xf32>
    %179 = arith.select %175, %178, %173 : vector<8x8xi1>, vector<8x8xf32>
    %180 = arith.addf %159, %179 : vector<8x8xf32>
    %cst_63 = arith.constant dense<0xFF800000> : vector<8xf32>
    %181 = vector.multi_reduction <maximumf>, %180, %cst_63 [1] : vector<8x8xf32> to vector<8xf32>
    %182 = vector.shape_cast %181 : vector<8xf32> to vector<8x1xf32>
    %183 = vector.broadcast %182 : vector<8x1xf32> to vector<8x8xf32>
    %184 = arith.subf %180, %183 : vector<8x8xf32>
    %185 = math.exp %184 : vector<8x8xf32>
    %cst_64 = arith.constant dense<0.000000e+00> : vector<8xf32>
    %186 = vector.multi_reduction <add>, %185, %cst_64 [1] : vector<8x8xf32> to vector<8xf32>
    %187 = vector.shape_cast %186 : vector<8xf32> to vector<8x1xf32>
    %188 = tpu.reciprocal %187 {approx = true} : vector<8x1xf32> -> vector<8x1xf32>
    %189 = vector.broadcast %188 : vector<8x1xf32> to vector<8x8xf32>
    %190 = arith.mulf %185, %189 : vector<8x8xf32>
    %191 = arith.truncf %190 : vector<8x8xf32> to vector<8x8xbf16>
    %cst_65 = arith.constant dense<0.000000e+00> : vector<8x8xf32>
    %192 = tpu.matmul %191, %158, %cst_65 {dimension_numbers = #tpu.dot_dimension_numbers<[1], [0], [0], [1], [0, 0, 1, 1], [], []>} : vector<8x8xbf16>, vector<8x8xbf16>, vector<8x8xf32> -> vector<8x8xf32>
    %c0_i32_66 = arith.constant 0 : i32
    %193 = vector.broadcast %c0_i32_66 : i32 to vector<8x8xi32>
    %194 = arith.cmpi eq, %20, %193 : vector<8x8xi32>
    %cst_67 = arith.constant 0.000000e+00 : f32
    %195 = vector.broadcast %cst_67 : f32 to vector<8x8xf32>
    %196 = arith.select %194, %190, %195 : vector<8x8xi1>, vector<8x8xf32>
    %cst_68 = arith.constant dense<0.000000e+00> : vector<8xf32>
    %197 = vector.multi_reduction <add>, %196, %cst_68 [1] : vector<8x8xf32> to vector<8xf32>
    %198 = vector.shape_cast %197 : vector<8xf32> to vector<8x1xf32>
    %c1_i32_69 = arith.constant 1 : i32
    %199 = vector.broadcast %c1_i32_69 : i32 to vector<8x8xi32>
    %200 = arith.cmpi eq, %20, %199 : vector<8x8xi32>
    %cst_70 = arith.constant 0.000000e+00 : f32
    %201 = vector.broadcast %cst_70 : f32 to vector<8x8xf32>
    %202 = arith.select %200, %190, %201 : vector<8x8xi1>, vector<8x8xf32>
    %cst_71 = arith.constant dense<0.000000e+00> : vector<8xf32>
    %203 = vector.multi_reduction <add>, %202, %cst_71 [1] : vector<8x8xf32> to vector<8xf32>
    %204 = vector.shape_cast %203 : vector<8xf32> to vector<8x1xf32>
    %c2_i32_72 = arith.constant 2 : i32
    %205 = vector.broadcast %c2_i32_72 : i32 to vector<8x8xi32>
    %206 = arith.cmpi eq, %20, %205 : vector<8x8xi32>
    %cst_73 = arith.constant 0.000000e+00 : f32
    %207 = vector.broadcast %cst_73 : f32 to vector<8x8xf32>
    %208 = arith.select %206, %190, %207 : vector<8x8xi1>, vector<8x8xf32>
    %cst_74 = arith.constant dense<0.000000e+00> : vector<8xf32>
    %209 = vector.multi_reduction <add>, %208, %cst_74 [1] : vector<8x8xf32> to vector<8xf32>
    %210 = vector.shape_cast %209 : vector<8xf32> to vector<8x1xf32>
    %211 = tpu.concatenate %198, %204, %210 in 1 : vector<8x1xf32>, vector<8x1xf32>, vector<8x1xf32> -> vector<8x3xf32>
    %212 = arith.truncf %211 : vector<8x3xf32> to vector<8x3xbf16>
    %cst_75 = arith.constant dense<0.000000e+00> : vector<8x8xf32>
    %213 = tpu.matmul %212, %15, %cst_75 {dimension_numbers = #tpu.dot_dimension_numbers<[1], [0], [0], [1], [0, 0, 1, 1], [], []>} : vector<8x3xbf16>, vector<3x8xbf16>, vector<8x8xf32> -> vector<8x8xf32>
    %214 = arith.addf %192, %213 : vector<8x8xf32>
    %215 = arith.truncf %214 : vector<8x8xf32> to vector<8x8xbf16>
    %216 = vector.extract_strided_slice %14 {offsets = [16, 0], sizes = [8, 32], strides = [1, 1]} : vector<32x32xbf16> to vector<8x32xbf16>
    %cst_76 = arith.constant dense<0.000000e+00> : vector<8x32xf32>
    %217 = tpu.matmul %215, %216, %cst_76 {dimension_numbers = #tpu.dot_dimension_numbers<[1], [0], [0], [1], [0, 0, 1, 1], [], []>} : vector<8x8xbf16>, vector<8x32xbf16>, vector<8x32xf32> -> vector<8x32xf32>
    %218 = arith.addf %155, %217 : vector<8x32xf32>
    %219 = vector.extract_strided_slice %22 {offsets = [0, 24], sizes = [8, 8], strides = [1, 1]} : vector<8x32xbf16> to vector<8x8xbf16>
    %220 = vector.extract_strided_slice %24 {offsets = [0, 24], sizes = [8, 8], strides = [1, 1]} : vector<8x32xbf16> to vector<8x8xbf16>
    %221 = vector.extract_strided_slice %26 {offsets = [0, 24], sizes = [8, 8], strides = [1, 1]} : vector<8x32xbf16> to vector<8x8xbf16>
    %cst_77 = arith.constant dense<0.000000e+00> : vector<8x8xf32>
    %222 = tpu.matmul %219, %220, %cst_77 {dimension_numbers = #tpu.dot_dimension_numbers<[1], [1], [0], [0], [0, 0, 1, 0], [], []>} : vector<8x8xbf16>, vector<8x8xbf16>, vector<8x8xf32> -> vector<8x8xf32>
    %223 = vector.extract_strided_slice %28 {offsets = [0, 9], sizes = [8, 3], strides = [1, 1]} : vector<8x12xf32> to vector<8x3xf32>
    %cst_78 = arith.constant 0.000000e+00 : f32
    %224 = vector.broadcast %cst_78 : f32 to vector<8x8xf32>
    %c0_i32_79 = arith.constant 0 : i32
    %225 = vector.broadcast %c0_i32_79 : i32 to vector<8x8xi32>
    %226 = arith.cmpi eq, %20, %225 : vector<8x8xi32>
    %227 = vector.extract_strided_slice %223 {offsets = [0, 0], sizes = [8, 1], strides = [1, 1]} : vector<8x3xf32> to vector<8x1xf32>
    %228 = vector.shape_cast %227 : vector<8x1xf32> to vector<8x1xf32>
    %229 = vector.broadcast %228 : vector<8x1xf32> to vector<8x8xf32>
    %230 = arith.select %226, %229, %224 : vector<8x8xi1>, vector<8x8xf32>
    %c1_i32_80 = arith.constant 1 : i32
    %231 = vector.broadcast %c1_i32_80 : i32 to vector<8x8xi32>
    %232 = arith.cmpi eq, %20, %231 : vector<8x8xi32>
    %233 = vector.extract_strided_slice %223 {offsets = [0, 1], sizes = [8, 1], strides = [1, 1]} : vector<8x3xf32> to vector<8x1xf32>
    %234 = vector.shape_cast %233 : vector<8x1xf32> to vector<8x1xf32>
    %235 = vector.broadcast %234 : vector<8x1xf32> to vector<8x8xf32>
    %236 = arith.select %232, %235, %230 : vector<8x8xi1>, vector<8x8xf32>
    %c2_i32_81 = arith.constant 2 : i32
    %237 = vector.broadcast %c2_i32_81 : i32 to vector<8x8xi32>
    %238 = arith.cmpi eq, %20, %237 : vector<8x8xi32>
    %239 = vector.extract_strided_slice %223 {offsets = [0, 2], sizes = [8, 1], strides = [1, 1]} : vector<8x3xf32> to vector<8x1xf32>
    %240 = vector.shape_cast %239 : vector<8x1xf32> to vector<8x1xf32>
    %241 = vector.broadcast %240 : vector<8x1xf32> to vector<8x8xf32>
    %242 = arith.select %238, %241, %236 : vector<8x8xi1>, vector<8x8xf32>
    %243 = arith.addf %222, %242 : vector<8x8xf32>
    %cst_82 = arith.constant dense<0xFF800000> : vector<8xf32>
    %244 = vector.multi_reduction <maximumf>, %243, %cst_82 [1] : vector<8x8xf32> to vector<8xf32>
    %245 = vector.shape_cast %244 : vector<8xf32> to vector<8x1xf32>
    %246 = vector.broadcast %245 : vector<8x1xf32> to vector<8x8xf32>
    %247 = arith.subf %243, %246 : vector<8x8xf32>
    %248 = math.exp %247 : vector<8x8xf32>
    %cst_83 = arith.constant dense<0.000000e+00> : vector<8xf32>
    %249 = vector.multi_reduction <add>, %248, %cst_83 [1] : vector<8x8xf32> to vector<8xf32>
    %250 = vector.shape_cast %249 : vector<8xf32> to vector<8x1xf32>
    %251 = tpu.reciprocal %250 {approx = true} : vector<8x1xf32> -> vector<8x1xf32>
    %252 = vector.broadcast %251 : vector<8x1xf32> to vector<8x8xf32>
    %253 = arith.mulf %248, %252 : vector<8x8xf32>
    %254 = arith.truncf %253 : vector<8x8xf32> to vector<8x8xbf16>
    %cst_84 = arith.constant dense<0.000000e+00> : vector<8x8xf32>
    %255 = tpu.matmul %254, %221, %cst_84 {dimension_numbers = #tpu.dot_dimension_numbers<[1], [0], [0], [1], [0, 0, 1, 1], [], []>} : vector<8x8xbf16>, vector<8x8xbf16>, vector<8x8xf32> -> vector<8x8xf32>
    %c0_i32_85 = arith.constant 0 : i32
    %256 = vector.broadcast %c0_i32_85 : i32 to vector<8x8xi32>
    %257 = arith.cmpi eq, %20, %256 : vector<8x8xi32>
    %cst_86 = arith.constant 0.000000e+00 : f32
    %258 = vector.broadcast %cst_86 : f32 to vector<8x8xf32>
    %259 = arith.select %257, %253, %258 : vector<8x8xi1>, vector<8x8xf32>
    %cst_87 = arith.constant dense<0.000000e+00> : vector<8xf32>
    %260 = vector.multi_reduction <add>, %259, %cst_87 [1] : vector<8x8xf32> to vector<8xf32>
    %261 = vector.shape_cast %260 : vector<8xf32> to vector<8x1xf32>
    %c1_i32_88 = arith.constant 1 : i32
    %262 = vector.broadcast %c1_i32_88 : i32 to vector<8x8xi32>
    %263 = arith.cmpi eq, %20, %262 : vector<8x8xi32>
    %cst_89 = arith.constant 0.000000e+00 : f32
    %264 = vector.broadcast %cst_89 : f32 to vector<8x8xf32>
    %265 = arith.select %263, %253, %264 : vector<8x8xi1>, vector<8x8xf32>
    %cst_90 = arith.constant dense<0.000000e+00> : vector<8xf32>
    %266 = vector.multi_reduction <add>, %265, %cst_90 [1] : vector<8x8xf32> to vector<8xf32>
    %267 = vector.shape_cast %266 : vector<8xf32> to vector<8x1xf32>
    %c2_i32_91 = arith.constant 2 : i32
    %268 = vector.broadcast %c2_i32_91 : i32 to vector<8x8xi32>
    %269 = arith.cmpi eq, %20, %268 : vector<8x8xi32>
    %cst_92 = arith.constant 0.000000e+00 : f32
    %270 = vector.broadcast %cst_92 : f32 to vector<8x8xf32>
    %271 = arith.select %269, %253, %270 : vector<8x8xi1>, vector<8x8xf32>
    %cst_93 = arith.constant dense<0.000000e+00> : vector<8xf32>
    %272 = vector.multi_reduction <add>, %271, %cst_93 [1] : vector<8x8xf32> to vector<8xf32>
    %273 = vector.shape_cast %272 : vector<8xf32> to vector<8x1xf32>
    %274 = tpu.concatenate %261, %267, %273 in 1 : vector<8x1xf32>, vector<8x1xf32>, vector<8x1xf32> -> vector<8x3xf32>
    %275 = arith.truncf %274 : vector<8x3xf32> to vector<8x3xbf16>
    %cst_94 = arith.constant dense<0.000000e+00> : vector<8x8xf32>
    %276 = tpu.matmul %275, %15, %cst_94 {dimension_numbers = #tpu.dot_dimension_numbers<[1], [0], [0], [1], [0, 0, 1, 1], [], []>} : vector<8x3xbf16>, vector<3x8xbf16>, vector<8x8xf32> -> vector<8x8xf32>
    %277 = arith.addf %255, %276 : vector<8x8xf32>
    %278 = arith.truncf %277 : vector<8x8xf32> to vector<8x8xbf16>
    %279 = vector.extract_strided_slice %14 {offsets = [24, 0], sizes = [8, 32], strides = [1, 1]} : vector<32x32xbf16> to vector<8x32xbf16>
    %cst_95 = arith.constant dense<0.000000e+00> : vector<8x32xf32>
    %280 = tpu.matmul %278, %279, %cst_95 {dimension_numbers = #tpu.dot_dimension_numbers<[1], [0], [0], [1], [0, 0, 1, 1], [], []>} : vector<8x8xbf16>, vector<8x32xbf16>, vector<8x32xf32> -> vector<8x32xf32>
    %281 = arith.addf %218, %280 : vector<8x32xf32>
    %282 = arith.index_cast %17 : i32 to index
    %c0_96 = arith.constant 0 : index
    %283 = vector.load %arg20[%282, %c0_96] : memref<8x32xf32, #tpu.memory_space<vmem>>, vector<8x32xf32>
    tpu.vector_store %arg20[%282, %c0_96], %281 {strides = array<i32>} : memref<8x32xf32, #tpu.memory_space<vmem>>, vector<8x32xf32>,
    %c1_i32_97 = arith.constant 1 : i32
    %c0_98 = arith.constant 0 : index
    %c0_99 = arith.constant 0 : index
    %284 = vector.load %arg20[%c0_98, %c0_99] : memref<8x32xf32, #tpu.memory_space<vmem>>, vector<8x32xf32>
    %c0_100 = arith.constant 0 : index
    %c0_101 = arith.constant 0 : index
    %285 = vector.load %arg8[%c0_100, %c0_101] : memref<1x32xf32, #tpu.memory_space<vmem>>, vector<1x32xf32>
    %286 = vector.broadcast %285 : vector<1x32xf32> to vector<8x32xf32>
    %287 = arith.addf %284, %286 : vector<8x32xf32>
    %288 = arith.addf %1, %287 : vector<8x32xf32>
    %c0_102 = arith.constant 0 : index
    %c0_103 = arith.constant 0 : index
    %289 = vector.load %arg9[%c0_102, %c0_103] : memref<1x32xf32, #tpu.memory_space<vmem>>, vector<1x32xf32>
    %c0_104 = arith.constant 0 : index
    %c0_105 = arith.constant 0 : index
    %290 = vector.load %arg10[%c0_104, %c0_105] : memref<1x32xf32, #tpu.memory_space<vmem>>, vector<1x32xf32>
    %cst_106 = arith.constant dense<0.000000e+00> : vector<8xf32>
    %291 = vector.multi_reduction <add>, %288, %cst_106 [1] : vector<8x32xf32> to vector<8xf32>
    %292 = vector.shape_cast %291 : vector<8xf32> to vector<8x1xf32>
    %cst_107 = arith.constant 3.200000e+01 : f32
    %293 = vector.broadcast %cst_107 : f32 to vector<8x1xf32>
    %294 = arith.divf %292, %293 : vector<8x1xf32>
    %295 = vector.broadcast %294 : vector<8x1xf32> to vector<8x32xf32>
    %296 = arith.subf %288, %295 : vector<8x32xf32>
    %297 = arith.mulf %296, %296 : vector<8x32xf32>
    %cst_108 = arith.constant dense<0.000000e+00> : vector<8xf32>
    %298 = vector.multi_reduction <add>, %297, %cst_108 [1] : vector<8x32xf32> to vector<8xf32>
    %299 = vector.shape_cast %298 : vector<8xf32> to vector<8x1xf32>
    %cst_109 = arith.constant 3.200000e+01 : f32
    %300 = vector.broadcast %cst_109 : f32 to vector<8x1xf32>
    %301 = arith.divf %299, %300 : vector<8x1xf32>
    %302 = vector.broadcast %294 : vector<8x1xf32> to vector<8x32xf32>
    %303 = arith.subf %288, %302 : vector<8x32xf32>
    %cst_110 = arith.constant 9.99999974E-6 : f32
    %304 = vector.broadcast %cst_110 : f32 to vector<8x1xf32>
    %305 = arith.addf %301, %304 : vector<8x1xf32>
    %306 = math.rsqrt %305 : vector<8x1xf32>
    %307 = vector.broadcast %306 : vector<8x1xf32> to vector<8x32xf32>
    %308 = arith.mulf %303, %307 : vector<8x32xf32>
    %309 = vector.broadcast %289 : vector<1x32xf32> to vector<8x32xf32>
    %310 = arith.mulf %308, %309 : vector<8x32xf32>
    %311 = vector.broadcast %290 : vector<1x32xf32> to vector<8x32xf32>
    %312 = arith.addf %310, %311 : vector<8x32xf32>
    %313 = arith.truncf %312 : vector<8x32xf32> to vector<8x32xbf16>
    %c0_111 = arith.constant 0 : index
    %c0_112 = arith.constant 0 : index
    %314 = vector.load %arg11[%c0_111, %c0_112] : memref<32x64xbf16, #tpu.memory_space<vmem>>, vector<32x64xbf16>
    %cst_113 = arith.constant dense<0.000000e+00> : vector<8x64xf32>
    %315 = tpu.matmul %313, %314, %cst_113 {dimension_numbers = #tpu.dot_dimension_numbers<[1], [0], [0], [1], [0, 0, 1, 1], [], []>} : vector<8x32xbf16>, vector<32x64xbf16>, vector<8x64xf32> -> vector<8x64xf32>
    %c0_114 = arith.constant 0 : index
    %c0_115 = arith.constant 0 : index
    %316 = vector.load %arg12[%c0_114, %c0_115] : memref<1x64xf32, #tpu.memory_space<vmem>>, vector<1x64xf32>
    %317 = vector.broadcast %316 : vector<1x64xf32> to vector<8x64xf32>
    %318 = arith.addf %315, %317 : vector<8x64xf32>
    %319 = arith.mulf %318, %318 : vector<8x64xf32>
    %320 = arith.mulf %318, %319 : vector<8x64xf32>
    %cst_116 = arith.constant 4.471500e-02 : f32
    %321 = vector.broadcast %cst_116 : f32 to vector<8x64xf32>
    %322 = arith.mulf %321, %320 : vector<8x64xf32>
    %323 = arith.addf %318, %322 : vector<8x64xf32>
    %cst_117 = arith.constant 0.797884583 : f32
    %324 = vector.broadcast %cst_117 : f32 to vector<8x64xf32>
    %325 = arith.mulf %324, %323 : vector<8x64xf32>
    %326 = math.tanh %325 : vector<8x64xf32>
    %cst_118 = arith.constant 1.000000e+00 : f32
    %327 = vector.broadcast %cst_118 : f32 to vector<8x64xf32>
    %328 = arith.addf %327, %326 : vector<8x64xf32>
    %cst_119 = arith.constant 5.000000e-01 : f32
    %329 = vector.broadcast %cst_119 : f32 to vector<8x64xf32>
    %330 = arith.mulf %329, %328 : vector<8x64xf32>
    %331 = arith.mulf %318, %330 : vector<8x64xf32>
    %332 = arith.truncf %331 : vector<8x64xf32> to vector<8x64xbf16>
    %c0_120 = arith.constant 0 : index
    %c0_121 = arith.constant 0 : index
    %333 = vector.load %arg13[%c0_120, %c0_121] : memref<64x32xbf16, #tpu.memory_space<vmem>>, vector<64x32xbf16>
    %cst_122 = arith.constant dense<0.000000e+00> : vector<8x32xf32>
    %334 = tpu.matmul %332, %333, %cst_122 {dimension_numbers = #tpu.dot_dimension_numbers<[1], [0], [0], [1], [0, 0, 1, 1], [], []>} : vector<8x64xbf16>, vector<64x32xbf16>, vector<8x32xf32> -> vector<8x32xf32>
    %c0_123 = arith.constant 0 : index
    %c0_124 = arith.constant 0 : index
    %335 = vector.load %arg14[%c0_123, %c0_124] : memref<1x32xf32, #tpu.memory_space<vmem>>, vector<1x32xf32>
    %336 = vector.broadcast %335 : vector<1x32xf32> to vector<8x32xf32>
    %337 = arith.addf %334, %336 : vector<8x32xf32>
    %338 = arith.addf %312, %337 : vector<8x32xf32>
    %c0_125 = arith.constant 0 : index
    %c0_126 = arith.constant 0 : index
    %339 = vector.load %arg15[%c0_125, %c0_126] : memref<1x32xf32, #tpu.memory_space<vmem>>, vector<1x32xf32>
    %c0_127 = arith.constant 0 : index
    %c0_128 = arith.constant 0 : index
    %340 = vector.load %arg16[%c0_127, %c0_128] : memref<1x32xf32, #tpu.memory_space<vmem>>, vector<1x32xf32>
    %cst_129 = arith.constant dense<0.000000e+00> : vector<8xf32>
    %341 = vector.multi_reduction <add>, %338, %cst_129 [1] : vector<8x32xf32> to vector<8xf32>
    %342 = vector.shape_cast %341 : vector<8xf32> to vector<8x1xf32>
    %cst_130 = arith.constant 3.200000e+01 : f32
    %343 = vector.broadcast %cst_130 : f32 to vector<8x1xf32>
    %344 = arith.divf %342, %343 : vector<8x1xf32>
    %345 = vector.broadcast %344 : vector<8x1xf32> to vector<8x32xf32>
    %346 = arith.subf %338, %345 : vector<8x32xf32>
    %347 = arith.mulf %346, %346 : vector<8x32xf32>
    %cst_131 = arith.constant dense<0.000000e+00> : vector<8xf32>
    %348 = vector.multi_reduction <add>, %347, %cst_131 [1] : vector<8x32xf32> to vector<8xf32>
    %349 = vector.shape_cast %348 : vector<8xf32> to vector<8x1xf32>
    %cst_132 = arith.constant 3.200000e+01 : f32
    %350 = vector.broadcast %cst_132 : f32 to vector<8x1xf32>
    %351 = arith.divf %349, %350 : vector<8x1xf32>
    %352 = vector.broadcast %344 : vector<8x1xf32> to vector<8x32xf32>
    %353 = arith.subf %338, %352 : vector<8x32xf32>
    %cst_133 = arith.constant 9.99999974E-6 : f32
    %354 = vector.broadcast %cst_133 : f32 to vector<8x1xf32>
    %355 = arith.addf %351, %354 : vector<8x1xf32>
    %356 = math.rsqrt %355 : vector<8x1xf32>
    %357 = vector.broadcast %356 : vector<8x1xf32> to vector<8x32xf32>
    %358 = arith.mulf %353, %357 : vector<8x32xf32>
    %359 = vector.broadcast %339 : vector<1x32xf32> to vector<8x32xf32>
    %360 = arith.mulf %358, %359 : vector<8x32xf32>
    %361 = vector.broadcast %340 : vector<1x32xf32> to vector<8x32xf32>
    %362 = arith.addf %360, %361 : vector<8x32xf32>
    %363 = vector.shape_cast %362 : vector<8x32xf32> to vector<1x8x32xf32>
    %c0_134 = arith.constant 0 : index
    %c0_135 = arith.constant 0 : index
    %c0_136 = arith.constant 0 : index
    %364 = vector.load %arg17[%c0_134, %c0_135, %c0_136] : memref<1x8x32xf32, #tpu.memory_space<vmem>>, vector<1x8x32xf32>
    tpu.vector_store %arg17[%c0_134, %c0_135, %c0_136], %363 {strides = array<i32>} : memref<1x8x32xf32, #tpu.memory_space<vmem>>, vector<1x8x32xf32>,
    return
  }
  func.func @transform_0(%arg0: i32) -> (i32, i32, i32) {
    %c0_i32 = arith.constant 0 : i32
    %c0_i32_0 = arith.constant 0 : i32
    %c0_i32_1 = arith.constant 0 : i32
    return %arg0, %c0_i32, %c0_i32_0 : i32, i32, i32
  }
  func.func @transform_1(%arg0: i32) -> (i32, i32, i32) {
    %c0_i32 = arith.constant 0 : i32
    %c0_i32_0 = arith.constant 0 : i32
    %c0_i32_1 = arith.constant 0 : i32
    return %arg0, %c0_i32, %c0_i32_0 : i32, i32, i32
  }
  func.func @transform_2(%arg0: i32) -> (i32, i32) {
    %c0_i32 = arith.constant 0 : i32
    %c0_i32_0 = arith.constant 0 : i32
    %c0_i32_1 = arith.constant 0 : i32
    return %c0_i32, %c0_i32_0 : i32, i32
  }
  func.func @transform_3(%arg0: i32) -> (i32, i32) {
    %c0_i32 = arith.constant 0 : i32
    %c0_i32_0 = arith.constant 0 : i32
    %c0_i32_1 = arith.constant 0 : i32
    return %c0_i32, %c0_i32_0 : i32, i32
  }
  func.func @transform_4(%arg0: i32) -> (i32, i32) {
    %c0_i32 = arith.constant 0 : i32
    %c0_i32_0 = arith.constant 0 : i32
    %c0_i32_1 = arith.constant 0 : i32
    return %c0_i32, %c0_i32_0 : i32, i32
  }
  func.func @transform_5(%arg0: i32) -> (i32, i32) {
    %c0_i32 = arith.constant 0 : i32
    %c0_i32_0 = arith.constant 0 : i32
    %c0_i32_1 = arith.constant 0 : i32
    return %c0_i32, %c0_i32_0 : i32, i32
  }
  func.func @transform_6(%arg0: i32) -> (i32, i32) {
    %c0_i32 = arith.constant 0 : i32
    %c0_i32_0 = arith.constant 0 : i32
    %c0_i32_1 = arith.constant 0 : i32
    return %c0_i32, %c0_i32_0 : i32, i32
  }
  func.func @transform_7(%arg0: i32) -> (i32, i32) {
    %c0_i32 = arith.constant 0 : i32
    %c0_i32_0 = arith.constant 0 : i32
    %c0_i32_1 = arith.constant 0 : i32
    return %c0_i32, %c0_i32_0 : i32, i32
  }
  func.func @transform_8(%arg0: i32) -> (i32, i32) {
    %c0_i32 = arith.constant 0 : i32
    %c0_i32_0 = arith.constant 0 : i32
    %c0_i32_1 = arith.constant 0 : i32
    return %c0_i32, %c0_i32_0 : i32, i32
  }
  func.func @transform_9(%arg0: i32) -> (i32, i32) {
    %c0_i32 = arith.constant 0 : i32
    %c0_i32_0 = arith.constant 0 : i32
    %c0_i32_1 = arith.constant 0 : i32
    return %c0_i32, %c0_i32_0 : i32, i32
  }
  func.func @transform_10(%arg0: i32) -> (i32, i32) {
    %c0_i32 = arith.constant 0 : i32
    %c0_i32_0 = arith.constant 0 : i32
    %c0_i32_1 = arith.constant 0 : i32
    return %c0_i32, %c0_i32_0 : i32, i32
  }
  func.func @transform_11(%arg0: i32) -> (i32, i32) {
    %c0_i32 = arith.constant 0 : i32
    %c0_i32_0 = arith.constant 0 : i32
    %c0_i32_1 = arith.constant 0 : i32
    return %c0_i32, %c0_i32_0 : i32, i32
  }
  func.func @transform_12(%arg0: i32) -> (i32, i32) {
    %c0_i32 = arith.constant 0 : i32
    %c0_i32_0 = arith.constant 0 : i32
    %c0_i32_1 = arith.constant 0 : i32
    return %c0_i32, %c0_i32_0 : i32, i32
  }
  func.func @transform_13(%arg0: i32) -> (i32, i32) {
    %c0_i32 = arith.constant 0 : i32
    %c0_i32_0 = arith.constant 0 : i32
    %c0_i32_1 = arith.constant 0 : i32
    return %c0_i32, %c0_i32_0 : i32, i32
  }
  func.func @transform_14(%arg0: i32) -> (i32, i32) {
    %c0_i32 = arith.constant 0 : i32
    %c0_i32_0 = arith.constant 0 : i32
    %c0_i32_1 = arith.constant 0 : i32
    return %c0_i32, %c0_i32_0 : i32, i32
  }
  func.func @transform_15(%arg0: i32) -> (i32, i32) {
    %c0_i32 = arith.constant 0 : i32
    %c0_i32_0 = arith.constant 0 : i32
    %c0_i32_1 = arith.constant 0 : i32
    return %c0_i32, %c0_i32_0 : i32, i32
  }
  func.func @transform_16(%arg0: i32) -> (i32, i32, i32) {
    %c0_i32 = arith.constant 0 : i32
    %c0_i32_0 = arith.constant 0 : i32
    %c0_i32_1 = arith.constant 0 : i32
    return %arg0, %c0_i32, %c0_i32_0 : i32, i32, i32
  }
}

</mosaic_0001>

<llo_original>
// kernel: tpu_custom_call.1
$region0: #{tpu_custom_call.1}
  #allocation0 [shape = 'u32[]', space=smem, size = 0x4, offset = 0x4, fixed_abs, tag = 'smem constant byte address 0x4 - core index']
  #allocation1 [shape = 'u32[144,128]{1,0:T(1,128)}', space=vmem, size = 0x12000, scoped, tag = 'internal scratch']
  #allocation2 [shape = 'bf16[8,96]{1,0:T(8,128)(2,1)}', space=vmem, size = 0x800, scoped, tag = 'scratch operand']
  #allocation3 [shape = 'f32[8,12]{1,0:T(8,128)}', space=vmem, size = 0x1000, scoped, tag = 'scratch operand']
  #allocation4 [shape = 'f32[8,32]{1,0:T(8,128)}', space=vmem, size = 0x1000, scoped, tag = 'scratch operand']
  %s0 = inlined_call_operand.vmem [shape: f32[2,8,32], index: 0, kind: input, shape index: {}]
  %s1 = inlined_call_operand.vmem [shape: s32[2,8,8], index: 1, kind: input, shape index: {}]
  %s2 = inlined_call_operand.vmem [shape: bf16[32,12], index: 2, kind: input, shape index: {}]
  %s3 = inlined_call_operand.vmem [shape: bf16[3,8], index: 3, kind: input, shape index: {}]
  %s4 = inlined_call_operand.vmem [shape: bf16[32,96], index: 4, kind: input, shape index: {}]
  %s5 = inlined_call_operand.hbm [shape: f32[1,96], index: 5, kind: input, shape index: {}]
  %s6 = inlined_call_operand.vmem [shape: bf16[32,32], index: 6, kind: input, shape index: {}]
  %s7 = inlined_call_operand.hbm [shape: f32[1,32], index: 7, kind: input, shape index: {}]
  %s8 = inlined_call_operand.vmem [shape: f32[1,32], index: 8, kind: input, shape index: {}]
  %s9 = inlined_call_operand.vmem [shape: f32[1,32], index: 9, kind: input, shape index: {}]
  %s10 = inlined_call_operand.vmem [shape: bf16[32,64], index: 10, kind: input, shape index: {}]
  %s11 = inlined_call_operand.vmem [shape: f32[1,64], index: 11, kind: input, shape index: {}]
  %s12 = inlined_call_operand.vmem [shape: bf16[64,32], index: 12, kind: input, shape index: {}]
  %s13 = inlined_call_operand.vmem [shape: f32[1,32], index: 13, kind: input, shape index: {}]
  %s14 = inlined_call_operand.vmem [shape: f32[1,32], index: 14, kind: input, shape index: {}]
  %s15 = inlined_call_operand.vmem [shape: f32[1,32], index: 15, kind: input, shape index: {}]
  %s16 = inlined_call_operand.hbm [shape: f32[2,8,32], index: 16, kind: output, shape index: {}]
  %s17 = sld [smem:[#allocation0]]
  $region105: #{tpu_custom_call.1} parent=0
    _
  %s19 = ssub.s32 1, %s17
  %s20 = scalar_select 0, %s19, %s17
  $region1: #{tpu_custom_call.1} parent=0
    #allocation5 [shape = 'u8[512]{0}', space=vmem, size = 0x400, scoped, tag = 'input window, operand 5, single buffered']
    #allocation6 [shape = 's32[2]{0}', space=sflag, size = 0x8, scoped, tag = 'scoped memory for tpu_custom_call.1']
    #allocation7 [shape = 's32[2]{0}', space=sflag, size = 0x8, scoped, tag = 'scoped memory for tpu_custom_call.1']
    #allocation8 [shape = 'u8[512]{0}', space=vmem, size = 0x400, scoped, tag = 'input window, operand 7, single buffered']
    #allocation9 [shape = 's32[1]{0}', space=sflag, size = 0x4, scoped, tag = 'scoped memory for tpu_custom_call.1']
    #allocation10 [shape = 'u8[8192]{0}', space=vmem, size = 0x2000, scoped, tag = 'output window, operand 0']
    %21 = vsyncpa [#allocation6], 0
    %22 = vsyncpa [#allocation9], 0
    %23 = vsyncpa [#allocation7], 0
    %s24 = scalar_lea.sflag [#allocation7], 1
    %25 = vsyncpa %s24, 0
    loop: start=0, step=1, limit=4
    $region2: #{tpu_custom_call.1} parent=1 // loop_pre_header
      _
    $region3: #{tpu_custom_call.1} parent=1 // loop_header
      %s27 = sphi 0, %s31
      %p28 = scmp.ge.s32.totalorder %s27, 4
      %s37 = sphi 0, %s39
      %s40 = sphi 0, %s37
      %s41 = sphi 0, %s40
      %s57 = sphi 0, %s41
      %s63 = sphi 0, %s65
      %s66 = sphi 0, %s63
      %s67 = sphi 0, %s66
      %s83 = sphi 0, %s67
      %s87 = sphi 0, %s87
      %s89 = sphi 0, %s87
      %s90 = sphi 0, %s89
      %s104 = sphi 0, %s90
      %s108 = sphi 0, %s108
      %s110 = sphi 0, %s108
      %s111 = sphi 0, %s110
      %s125 = sphi 0, %s111
      %s129 = sphi 0, %s129
      %s131 = sphi 0, %s129
      %s132 = sphi 0, %s131
      %s146 = sphi 0, %s132
      %s150 = sphi 0, %s150
      %s152 = sphi 0, %s150
      %s153 = sphi 0, %s152
      %s167 = sphi 0, %s153
      %s171 = sphi 0, %s171
      %s173 = sphi 0, %s171
      %s174 = sphi 0, %s173
      %s188 = sphi 0, %s174
      %s192 = sphi 0, %s192
      %s194 = sphi 0, %s192
      %s195 = sphi 0, %s194
      %s209 = sphi 0, %s195
      %s213 = sphi 0, %s213
      %s215 = sphi 0, %s213
      %s216 = sphi 0, %s215
      %s230 = sphi 0, %s216
      %s234 = sphi 0, %s234
      %s236 = sphi 0, %s234
      %s237 = sphi 0, %s236
      %s251 = sphi 0, %s237
      %s255 = sphi 0, %s255
      %s257 = sphi 0, %s255
      %s258 = sphi 0, %s257
      %s272 = sphi 0, %s258
      %s276 = sphi 0, %s276
      %s278 = sphi 0, %s276
      %s279 = sphi 0, %s278
      %s293 = sphi 0, %s279
      %s297 = sphi 0, %s297
      %s299 = sphi 0, %s297
      %s300 = sphi 0, %s299
      %s314 = sphi 0, %s300
      %s318 = sphi 0, %s318
      %s320 = sphi 0, %s318
      %s321 = sphi 0, %s320
      %s335 = sphi 0, %s321
      %s339 = sphi 0, %s339
      %s341 = sphi 0, %s339
      %s342 = sphi 0, %s341
      %s356 = sphi 0, %s342
      %s360 = sphi 0, %s360
      %s362 = sphi 0, %s360
      %s363 = sphi 0, %s362
      %s377 = sphi 0, %s363
      %s383 = sphi 0, %s385
      %s386 = sphi 0, %s383
      %s387 = sphi 0, %s386
      %s403 = sphi 0, %s387
    $region4: #{tpu_custom_call.1} parent=1 // loop_header_branch
      %30 = sbr.rel (%p28) target = $region8
    $region5: #{tpu_custom_call.1} parent=1 // loop_body
      %s32 = ssub.s32 %s27, 1
      %s33 = ssub.s32 %s27, 2
      %s34 = sadd.s32 %s27, 1
      %s35 = ssub.s32 %s27, %s34
      %p36 = scmp.eq.s32.totalorder %s35, 0
      %s38 = sadd.s32 %s37, 1
      %s39 = scalar_select %p36, %s37, %s38
      %p42 = pneg %p36
      %p43 = scmp.eq.s32.totalorder %s27, 1
      %p44 = por %p42, %p43
      %p45 = scmp.ne.s32.totalorder %s37, %s40
      %p46 = scmp.eq.s32.totalorder %s27, 0
      %p47 = por %p45, %p46
      %p48 = scmp.ne.s32.totalorder %s37, %s40
      %p49 = scmp.eq.s32.totalorder %s32, 1
      %p50 = por %p48, %p49
      %p51 = scmp.ne.s32.totalorder %s40, %s41
      %p52 = scmp.eq.s32.totalorder %s32, 0
      %p53 = por %p51, %p52
      %p54 = scmp.ne.s32.totalorder %s40, %s41
      %p55 = scmp.eq.s32.totalorder %s33, 1
      %p56 = por %p54, %p55
      %p58 = scmp.ne.s32.totalorder %s41, %s57
      %p59 = scmp.eq.s32.totalorder %s33, 0
      %p60 = por %p58, %p59
      %s61 = ssub.s32 %s27, %s34
      %p62 = scmp.eq.s32.totalorder %s61, 0
      %s64 = sadd.s32 %s63, 1
      %s65 = scalar_select %p62, %s63, %s64
      %p68 = pneg %p62
      %p69 = scmp.eq.s32.totalorder %s27, 1
      %p70 = por %p68, %p69
      %p71 = scmp.ne.s32.totalorder %s63, %s66
      %p72 = scmp.eq.s32.totalorder %s27, 0
      %p73 = por %p71, %p72
      %p74 = scmp.ne.s32.totalorder %s63, %s66
      %p75 = scmp.eq.s32.totalorder %s32, 1
      %p76 = por %p74, %p75
      %p77 = scmp.ne.s32.totalorder %s66, %s67
      %p78 = scmp.eq.s32.totalorder %s32, 0
      %p79 = por %p77, %p78
      %p80 = scmp.ne.s32.totalorder %s66, %s67
      %p81 = scmp.eq.s32.totalorder %s33, 1
      %p82 = por %p80, %p81
      %p84 = scmp.ne.s32.totalorder %s67, %s83
      %p85 = scmp.eq.s32.totalorder %s33, 0
      %p86 = por %p84, %p85
      %s88 = sadd.s32 %s87, 1
      %p91 = scmp.eq.s32.totalorder %s27, 1
      %p92 = scmp.ne.s32.totalorder %s87, %s89
      %p93 = scmp.eq.s32.totalorder %s27, 0
      %p94 = por %p92, %p93
      %p95 = scmp.ne.s32.totalorder %s87, %s89
      %p96 = scmp.eq.s32.totalorder %s32, 1
      %p97 = por %p95, %p96
      %p98 = scmp.ne.s32.totalorder %s89, %s90
      %p99 = scmp.eq.s32.totalorder %s32, 0
      %p100 = por %p98, %p99
      %p101 = scmp.ne.s32.totalorder %s89, %s90
      %p102 = scmp.eq.s32.totalorder %s33, 1
      %p103 = por %p101, %p102
      %p105 = scmp.ne.s32.totalorder %s90, %s104
      %p106 = scmp.eq.s32.totalorder %s33, 0
      %p107 = por %p105, %p106
      %s109 = sadd.s32 %s108, 1
      %p112 = scmp.eq.s32.totalorder %s27, 1
      %p113 = scmp.ne.s32.totalorder %s108, %s110
      %p114 = scmp.eq.s32.totalorder %s27, 0
      %p115 = por %p113, %p114
      %p116 = scmp.ne.s32.totalorder %s108, %s110
      %p117 = scmp.eq.s32.totalorder %s32, 1
      %p118 = por %p116, %p117
      %p119 = scmp.ne.s32.totalorder %s110, %s111
      %p120 = scmp.eq.s32.totalorder %s32, 0
      %p121 = por %p119, %p120
      %p122 = scmp.ne.s32.totalorder %s110, %s111
      %p123 = scmp.eq.s32.totalorder %s33, 1
      %p124 = por %p122, %p123
      %p126 = scmp.ne.s32.totalorder %s111, %s125
      %p127 = scmp.eq.s32.totalorder %s33, 0
      %p128 = por %p126, %p127
      %s130 = sadd.s32 %s129, 1
      %p133 = scmp.eq.s32.totalorder %s27, 1
      %p134 = scmp.ne.s32.totalorder %s129, %s131
      %p135 = scmp.eq.s32.totalorder %s27, 0
      %p136 = por %p134, %p135
      %p137 = scmp.ne.s32.totalorder %s129, %s131
      %p138 = scmp.eq.s32.totalorder %s32, 1
      %p139 = por %p137, %p138
      %p140 = scmp.ne.s32.totalorder %s131, %s132
      %p141 = scmp.eq.s32.totalorder %s32, 0
      %p142 = por %p140, %p141
      %p143 = scmp.ne.s32.totalorder %s131, %s132
      %p144 = scmp.eq.s32.totalorder %s33, 1
      %p145 = por %p143, %p144
      %p147 = scmp.ne.s32.totalorder %s132, %s146
      %p148 = scmp.eq.s32.totalorder %s33, 0
      %p149 = por %p147, %p148
      %s151 = sadd.s32 %s150, 1
      %p154 = scmp.eq.s32.totalorder %s27, 1
      %p155 = scmp.ne.s32.totalorder %s150, %s152
      %p156 = scmp.eq.s32.totalorder %s27, 0
      %p157 = por %p155, %p156
      %p158 = scmp.ne.s32.totalorder %s150, %s152
      %p159 = scmp.eq.s32.totalorder %s32, 1
      %p160 = por %p158, %p159
      %p161 = scmp.ne.s32.totalorder %s152, %s153
      %p162 = scmp.eq.s32.totalorder %s32, 0
      %p163 = por %p161, %p162
      %p164 = scmp.ne.s32.totalorder %s152, %s153
      %p165 = scmp.eq.s32.totalorder %s33, 1
      %p166 = por %p164, %p165
      %p168 = scmp.ne.s32.totalorder %s153, %s167
      %p169 = scmp.eq.s32.totalorder %s33, 0
      %p170 = por %p168, %p169
      %s172 = sadd.s32 %s171, 1
      %p175 = scmp.eq.s32.totalorder %s27, 1
      %p176 = scmp.ne.s32.totalorder %s171, %s173
      %p177 = scmp.eq.s32.totalorder %s27, 0
      %p178 = por %p176, %p177
      %p179 = scmp.ne.s32.totalorder %s171, %s173
      %p180 = scmp.eq.s32.totalorder %s32, 1
      %p181 = por %p179, %p180
      %p182 = scmp.ne.s32.totalorder %s173, %s174
      %p183 = scmp.eq.s32.totalorder %s32, 0
      %p184 = por %p182, %p183
      %p185 = scmp.ne.s32.totalorder %s173, %s174
      %p186 = scmp.eq.s32.totalorder %s33, 1
      %p187 = por %p185, %p186
      %p189 = scmp.ne.s32.totalorder %s174, %s188
      %p190 = scmp.eq.s32.totalorder %s33, 0
      %p191 = por %p189, %p190
      %s193 = sadd.s32 %s192, 1
      %p196 = scmp.eq.s32.totalorder %s27, 1
      %p197 = scmp.ne.s32.totalorder %s192, %s194
      %p198 = scmp.eq.s32.totalorder %s27, 0
      %p199 = por %p197, %p198
      %p200 = scmp.ne.s32.totalorder %s192, %s194
      %p201 = scmp.eq.s32.totalorder %s32, 1
      %p202 = por %p200, %p201
      %p203 = scmp.ne.s32.totalorder %s194, %s195
      %p204 = scmp.eq.s32.totalorder %s32, 0
      %p205 = por %p203, %p204
      %p206 = scmp.ne.s32.totalorder %s194, %s195
      %p207 = scmp.eq.s32.totalorder %s33, 1
      %p208 = por %p206, %p207
      %p210 = scmp.ne.s32.totalorder %s195, %s209
      %p211 = scmp.eq.s32.totalorder %s33, 0
      %p212 = por %p210, %p211
      %s214 = sadd.s32 %s213, 1
      %p217 = scmp.eq.s32.totalorder %s27, 1
      %p218 = scmp.ne.s32.totalorder %s213, %s215
      %p219 = scmp.eq.s32.totalorder %s27, 0
      %p220 = por %p218, %p219
      %p221 = scmp.ne.s32.totalorder %s213, %s215
      %p222 = scmp.eq.s32.totalorder %s32, 1
      %p223 = por %p221, %p222
      %p224 = scmp.ne.s32.totalorder %s215, %s216
      %p225 = scmp.eq.s32.totalorder %s32, 0
      %p226 = por %p224, %p225
      %p227 = scmp.ne.s32.totalorder %s215, %s216
      %p228 = scmp.eq.s32.totalorder %s33, 1
      %p229 = por %p227, %p228
      %p231 = scmp.ne.s32.totalorder %s216, %s230
      %p232 = scmp.eq.s32.totalorder %s33, 0
      %p233 = por %p231, %p232
      %s235 = sadd.s32 %s234, 1
      %p238 = scmp.eq.s32.totalorder %s27, 1
      %p239 = scmp.ne.s32.totalorder %s234, %s236
      %p240 = scmp.eq.s32.totalorder %s27, 0
      %p241 = por %p239, %p240
      %p242 = scmp.ne.s32.totalorder %s234, %s236
      %p243 = scmp.eq.s32.totalorder %s32, 1
      %p244 = por %p242, %p243
      %p245 = scmp.ne.s32.totalorder %s236, %s237
      %p246 = scmp.eq.s32.totalorder %s32, 0
      %p247 = por %p245, %p246
      %p248 = scmp.ne.s32.totalorder %s236, %s237
      %p249 = scmp.eq.s32.totalorder %s33, 1
      %p250 = por %p248, %p249
      %p252 = scmp.ne.s32.totalorder %s237, %s251
      %p253 = scmp.eq.s32.totalorder %s33, 0
      %p254 = por %p252, %p253
      %s256 = sadd.s32 %s255, 1
      %p259 = scmp.eq.s32.totalorder %s27, 1
      %p260 = scmp.ne.s32.totalorder %s255, %s257
      %p261 = scmp.eq.s32.totalorder %s27, 0
      %p262 = por %p260, %p261
      %p263 = scmp.ne.s32.totalorder %s255, %s257
      %p264 = scmp.eq.s32.totalorder %s32, 1
      %p265 = por %p263, %p264
      %p266 = scmp.ne.s32.totalorder %s257, %s258
      %p267 = scmp.eq.s32.totalorder %s32, 0
      %p268 = por %p266, %p267
      %p269 = scmp.ne.s32.totalorder %s257, %s258
      %p270 = scmp.eq.s32.totalorder %s33, 1
      %p271 = por %p269, %p270
      %p273 = scmp.ne.s32.totalorder %s258, %s272
      %p274 = scmp.eq.s32.totalorder %s33, 0
      %p275 = por %p273, %p274
      %s277 = sadd.s32 %s276, 1
      %p280 = scmp.eq.s32.totalorder %s27, 1
      %p281 = scmp.ne.s32.totalorder %s276, %s278
      %p282 = scmp.eq.s32.totalorder %s27, 0
      %p283 = por %p281, %p282
      %p284 = scmp.ne.s32.totalorder %s276, %s278
      %p285 = scmp.eq.s32.totalorder %s32, 1
      %p286 = por %p284, %p285
      %p287 = scmp.ne.s32.totalorder %s278, %s279
      %p288 = scmp.eq.s32.totalorder %s32, 0
      %p289 = por %p287, %p288
      %p290 = scmp.ne.s32.totalorder %s278, %s279
      %p291 = scmp.eq.s32.totalorder %s33, 1
      %p292 = por %p290, %p291
      %p294 = scmp.ne.s32.totalorder %s279, %s293
      %p295 = scmp.eq.s32.totalorder %s33, 0
      %p296 = por %p294, %p295
      %s298 = sadd.s32 %s297, 1
      %p301 = scmp.eq.s32.totalorder %s27, 1
      %p302 = scmp.ne.s32.totalorder %s297, %s299
      %p303 = scmp.eq.s32.totalorder %s27, 0
      %p304 = por %p302, %p303
      %p305 = scmp.ne.s32.totalorder %s297, %s299
      %p306 = scmp.eq.s32.totalorder %s32, 1
      %p307 = por %p305, %p306
      %p308 = scmp.ne.s32.totalorder %s299, %s300
      %p309 = scmp.eq.s32.totalorder %s32, 0
      %p310 = por %p308, %p309
      %p311 = scmp.ne.s32.totalorder %s299, %s300
      %p312 = scmp.eq.s32.totalorder %s33, 1
      %p313 = por %p311, %p312
      %p315 = scmp.ne.s32.totalorder %s300, %s314
      %p316 = scmp.eq.s32.totalorder %s33, 0
      %p317 = por %p315, %p316
      %s319 = sadd.s32 %s318, 1
      %p322 = scmp.eq.s32.totalorder %s27, 1
      %p323 = scmp.ne.s32.totalorder %s318, %s320
      %p324 = scmp.eq.s32.totalorder %s27, 0
      %p325 = por %p323, %p324
      %p326 = scmp.ne.s32.totalorder %s318, %s320
      %p327 = scmp.eq.s32.totalorder %s32, 1
      %p328 = por %p326, %p327
      %p329 = scmp.ne.s32.totalorder %s320, %s321
      %p330 = scmp.eq.s32.totalorder %s32, 0
      %p331 = por %p329, %p330
      %p332 = scmp.ne.s32.totalorder %s320, %s321
      %p333 = scmp.eq.s32.totalorder %s33, 1
      %p334 = por %p332, %p333
      %p336 = scmp.ne.s32.totalorder %s321, %s335
      %p337 = scmp.eq.s32.totalorder %s33, 0
      %p338 = por %p336, %p337
      %s340 = sadd.s32 %s339, 1
      %p343 = scmp.eq.s32.totalorder %s27, 1
      %p344 = scmp.ne.s32.totalorder %s339, %s341
      %p345 = scmp.eq.s32.totalorder %s27, 0
      %p346 = por %p344, %p345
      %p347 = scmp.ne.s32.totalorder %s339, %s341
      %p348 = scmp.eq.s32.totalorder %s32, 1
      %p349 = por %p347, %p348
      %p350 = scmp.ne.s32.totalorder %s341, %s342
      %p351 = scmp.eq.s32.totalorder %s32, 0
      %p352 = por %p350, %p351
      %p353 = scmp.ne.s32.totalorder %s341, %s342
      %p354 = scmp.eq.s32.totalorder %s33, 1
      %p355 = por %p353, %p354
      %p357 = scmp.ne.s32.totalorder %s342, %s356
      %p358 = scmp.eq.s32.totalorder %s33, 0
      %p359 = por %p357, %p358
      %s361 = sadd.s32 %s360, 1
      %p364 = scmp.eq.s32.totalorder %s27, 1
      %p365 = scmp.ne.s32.totalorder %s360, %s362
      %p366 = scmp.eq.s32.totalorder %s27, 0
      %p367 = por %p365, %p366
      %p368 = scmp.ne.s32.totalorder %s360, %s362
      %p369 = scmp.eq.s32.totalorder %s32, 1
      %p370 = por %p368, %p369
      %p371 = scmp.ne.s32.totalorder %s362, %s363
      %p372 = scmp.eq.s32.totalorder %s32, 0
      %p373 = por %p371, %p372
      %p374 = scmp.ne.s32.totalorder %s362, %s363
      %p375 = scmp.eq.s32.totalorder %s33, 1
      %p376 = por %p374, %p375
      %p378 = scmp.ne.s32.totalorder %s363, %s377
      %p379 = scmp.eq.s32.totalorder %s33, 0
      %p380 = por %p378, %p379
      %s381 = ssub.s32 %s27, %s34
      %p382 = scmp.eq.s32.totalorder %s381, 0
      %s384 = sadd.s32 %s383, 1
      %s385 = scalar_select %p382, %s383, %s384
      %p388 = pneg %p382
      %p389 = scmp.eq.s32.totalorder %s27, 1
      %p390 = por %p388, %p389
      %p391 = scmp.ne.s32.totalorder %s383, %s386
      %p392 = scmp.eq.s32.totalorder %s27, 0
      %p393 = por %p391, %p392
      %p394 = scmp.ne.s32.totalorder %s383, %s386
      %p395 = scmp.eq.s32.totalorder %s32, 1
      %p396 = por %p394, %p395
      %p397 = scmp.ne.s32.totalorder %s386, %s387
      %p398 = scmp.eq.s32.totalorder %s32, 0
      %p399 = por %p397, %p398
      %p400 = scmp.ne.s32.totalorder %s386, %s387
      %p401 = scmp.eq.s32.totalorder %s33, 1
      %p402 = por %p400, %p401
      %p404 = scmp.ne.s32.totalorder %s387, %s403
      %p405 = scmp.eq.s32.totalorder %s33, 0
      %p406 = por %p404, %p405
      %p407 = scmp.le.s32.totalorder 1, %s27
      %p408 = scmp.lt.s32.totalorder %s27, 3
      %p409 = pnand %p407, %p408
      %p410 = pneg %p409
      // Predicated region
      $region9: #{tpu_custom_call.1} parent=5 // pred_check
        _
      $region10: #{tpu_custom_call.1} parent=5 // pred_check_branch
        %412 = sbr.rel (%p409) target = $region12
      $region11: #{tpu_custom_call.1} parent=5 // pred_region
        %s413 = ssub.s32 %s27, 1
        // Predicated region
        $region13: #{tpu_custom_call.1} parent=11 // pred_check
          %p414 = pneg %p100
        $region14: #{tpu_custom_call.1} parent=11 // pred_check_branch
          %416 = sbr.rel (%p414) target = $region16
        $region15: #{tpu_custom_call.1} parent=11 // pred_region
          _
        $region16: #{tpu_custom_call.1} parent=11 // pred_fallthru
          _
        // Predicated region
        $region17: #{tpu_custom_call.1} parent=11 // pred_check
          %p417 = pneg %p121
        $region18: #{tpu_custom_call.1} parent=11 // pred_check_branch
          %419 = sbr.rel (%p417) target = $region20
        $region19: #{tpu_custom_call.1} parent=11 // pred_region
          _
        $region20: #{tpu_custom_call.1} parent=11 // pred_fallthru
          _
        // Predicated region
        $region21: #{tpu_custom_call.1} parent=11 // pred_check
          %p420 = pneg %p142
        $region22: #{tpu_custom_call.1} parent=11 // pred_check_branch
          %422 = sbr.rel (%p420) target = $region24
        $region23: #{tpu_custom_call.1} parent=11 // pred_region
          _
        $region24: #{tpu_custom_call.1} parent=11 // pred_fallthru
          _
        // Predicated region
        $region25: #{tpu_custom_call.1} parent=11 // pred_check
          %p423 = pneg %p163
        $region26: #{tpu_custom_call.1} parent=11 // pred_check_branch
          %425 = sbr.rel (%p423) target = $region28
        $region27: #{tpu_custom_call.1} parent=11 // pred_region
          %s427 = ssub.s32 16, 16
          %428 = vsyncadd [#allocation6], %s427
          %s430 = sshll.u32 [#allocation5], 4
          %s431 = int_to_ptr.vmem [resolvable:$true] %s430
          %433 = dma.hbm_to_vmem [thread:$0]  %s5, 16, %s431, [#allocation6]
        $region28: #{tpu_custom_call.1} parent=11 // pred_fallthru
          _
        // Predicated region
        $region29: #{tpu_custom_call.1} parent=11 // pred_check
          %p434 = pneg %p184
        $region30: #{tpu_custom_call.1} parent=11 // pred_check_branch
          %436 = sbr.rel (%p434) target = $region32
        $region31: #{tpu_custom_call.1} parent=11 // pred_region
          _
        $region32: #{tpu_custom_call.1} parent=11 // pred_fallthru
          _
        // Predicated region
        $region33: #{tpu_custom_call.1} parent=11 // pred_check
          %p437 = pneg %p205
        $region34: #{tpu_custom_call.1} parent=11 // pred_check_branch
          %439 = sbr.rel (%p437) target = $region36
        $region35: #{tpu_custom_call.1} parent=11 // pred_region
          %s441 = ssub.s32 16, 16
          %442 = vsyncadd [#allocation9], %s441
          %s444 = sshll.u32 [#allocation8], 4
          %s445 = int_to_ptr.vmem [resolvable:$true] %s444
          %447 = dma.hbm_to_vmem [thread:$0]  %s7, 16, %s445, [#allocation9]
        $region36: #{tpu_custom_call.1} parent=11 // pred_fallthru
          _
        // Predicated region
        $region37: #{tpu_custom_call.1} parent=11 // pred_check
          %p448 = pneg %p226
        $region38: #{tpu_custom_call.1} parent=11 // pred_check_branch
          %450 = sbr.rel (%p448) target = $region40
        $region39: #{tpu_custom_call.1} parent=11 // pred_region
          _
        $region40: #{tpu_custom_call.1} parent=11 // pred_fallthru
          _
        // Predicated region
        $region41: #{tpu_custom_call.1} parent=11 // pred_check
          %p451 = pneg %p247
        $region42: #{tpu_custom_call.1} parent=11 // pred_check_branch
          %453 = sbr.rel (%p451) target = $region44
        $region43: #{tpu_custom_call.1} parent=11 // pred_region
          _
        $region44: #{tpu_custom_call.1} parent=11 // pred_fallthru
          _
        // Predicated region
        $region45: #{tpu_custom_call.1} parent=11 // pred_check
          %p454 = pneg %p268
        $region46: #{tpu_custom_call.1} parent=11 // pred_check_branch
          %456 = sbr.rel (%p454) target = $region48
        $region47: #{tpu_custom_call.1} parent=11 // pred_region
          _
        $region48: #{tpu_custom_call.1} parent=11 // pred_fallthru
          _
        // Predicated region
        $region49: #{tpu_custom_call.1} parent=11 // pred_check
          %p457 = pneg %p289
        $region50: #{tpu_custom_call.1} parent=11 // pred_check_branch
          %459 = sbr.rel (%p457) target = $region52
        $region51: #{tpu_custom_call.1} parent=11 // pred_region
          _
        $region52: #{tpu_custom_call.1} parent=11 // pred_fallthru
          _
        // Predicated region
        $region53: #{tpu_custom_call.1} parent=11 // pred_check
          %p460 = pneg %p310
        $region54: #{tpu_custom_call.1} parent=11 // pred_check_branch
          %462 = sbr.rel (%p460) target = $region56
        $region55: #{tpu_custom_call.1} parent=11 // pred_region
          _
        $region56: #{tpu_custom_call.1} parent=11 // pred_fallthru
          _
        // Predicated region
        $region57: #{tpu_custom_call.1} parent=11 // pred_check
          %p463 = pneg %p331
        $region58: #{tpu_custom_call.1} parent=11 // pred_check_branch
          %465 = sbr.rel (%p463) target = $region60
        $region59: #{tpu_custom_call.1} parent=11 // pred_region
          _
        $region60: #{tpu_custom_call.1} parent=11 // pred_fallthru
          _
        // Predicated region
        $region61: #{tpu_custom_call.1} parent=11 // pred_check
          %p466 = pneg %p352
        $region62: #{tpu_custom_call.1} parent=11 // pred_check_branch
          %468 = sbr.rel (%p466) target = $region64
        $region63: #{tpu_custom_call.1} parent=11 // pred_region
          _
        $region64: #{tpu_custom_call.1} parent=11 // pred_fallthru
          _
        // Predicated region
        $region65: #{tpu_custom_call.1} parent=11 // pred_check
          %p469 = pneg %p373
        $region66: #{tpu_custom_call.1} parent=11 // pred_check_branch
          %471 = sbr.rel (%p469) target = $region68
        $region67: #{tpu_custom_call.1} parent=11 // pred_region
          _
        $region68: #{tpu_custom_call.1} parent=11 // pred_fallthru
          _
      $region12: #{tpu_custom_call.1} parent=5 // pred_fallthru
        _
      %p472 = scmp.lt.s32.totalorder %s27, 2
      // Predicated region
      $region69: #{tpu_custom_call.1} parent=5 // pred_check
        %p473 = pneg %p472
      $region70: #{tpu_custom_call.1} parent=5 // pred_check_branch
        %475 = sbr.rel (%p473) target = $region72
      $region71: #{tpu_custom_call.1} parent=5 // pred_region
        // Predicated region
        $region73: #{tpu_custom_call.1} parent=71 // pred_check
          %p476 = pneg %p47
        $region74: #{tpu_custom_call.1} parent=71 // pred_check_branch
          %478 = sbr.rel (%p476) target = $region76
        $region75: #{tpu_custom_call.1} parent=71 // pred_region
          %p479 = scmp.lt.s32.totalorder %s27, 1
          %s480 = scalar_select %p479, %s27, 1
          %s481 = smul.addr %s480, 8
          %s482 = scalar_lea.vmem %s0, %s481
        $region76: #{tpu_custom_call.1} parent=71 // pred_fallthru
          _
        // Predicated region
        $region77: #{tpu_custom_call.1} parent=71 // pred_check
          %p483 = pneg %p73
        $region78: #{tpu_custom_call.1} parent=71 // pred_check_branch
          %485 = sbr.rel (%p483) target = $region80
        $region79: #{tpu_custom_call.1} parent=71 // pred_region
          %p486 = scmp.lt.s32.totalorder %s27, 1
          %s487 = scalar_select %p486, %s27, 1
          %s488 = smul.addr %s487, 8
          %s489 = scalar_lea.vmem %s1, %s488
        $region80: #{tpu_custom_call.1} parent=71 // pred_fallthru
          _
      $region72: #{tpu_custom_call.1} parent=5 // pred_fallthru
        _
      %p490 = scmp.le.s32.totalorder 1, %s27
      %p491 = scmp.lt.s32.totalorder %s27, 3
      %p492 = pnand %p490, %p491
      %p493 = pneg %p492
      // Predicated region
      $region81: #{tpu_custom_call.1} parent=5 // pred_check
        _
      $region82: #{tpu_custom_call.1} parent=5 // pred_check_branch
        %495 = sbr.rel (%p492) target = $region84
      $region83: #{tpu_custom_call.1} parent=5 // pred_region
        %s496 = ssub.s32 %s27, 1
        // Predicated region
        $region85: #{tpu_custom_call.1} parent=83 // pred_check
          %p497 = pneg %p163
        $region86: #{tpu_custom_call.1} parent=83 // pred_check_branch
          %499 = sbr.rel (%p497) target = $region88
        $region87: #{tpu_custom_call.1} parent=83 // pred_region
          %500 = dma.done [#allocation6], 16
        $region88: #{tpu_custom_call.1} parent=83 // pred_fallthru
          _
        // Predicated region
        $region89: #{tpu_custom_call.1} parent=83 // pred_check
          %p501 = pneg %p205
        $region90: #{tpu_custom_call.1} parent=83 // pred_check_branch
          %503 = sbr.rel (%p501) target = $region92
        $region91: #{tpu_custom_call.1} parent=83 // pred_region
          %504 = dma.done [#allocation9], 16
        $region92: #{tpu_custom_call.1} parent=83 // pred_fallthru
          _
        %p505 = scmp.lt.s32.totalorder %s32, 1
        %s506 = scalar_select %p505, %s32, 1
        %s507 = smul.addr %s506, 8
        %s508 = scalar_lea.vmem %s0, %s507
        %p509 = pneg %p53
        %p510 = pneg %p50
        %p511 = scmp.lt.s32.totalorder %s32, 1
        %s512 = scalar_select %p511, %s32, 1
        %s513 = smul.addr %s512, 8
        %s514 = scalar_lea.vmem %s1, %s513
        %p515 = pneg %p79
        %p516 = pneg %p76
        %p517 = pneg %p100
        %p518 = pneg %p97
        %p519 = pneg %p121
        %p520 = pneg %p118
        %p521 = pneg %p142
        %p522 = pneg %p139
        %p523 = pneg %p163
        %p524 = pneg %p160
        %p525 = pneg %p184
        %p526 = pneg %p181
        %p527 = pneg %p205
        %p528 = pneg %p202
        %p529 = pneg %p226
        %p530 = pneg %p223
        %p531 = pneg %p247
        %p532 = pneg %p244
        %p533 = pneg %p268
        %p534 = pneg %p265
        %p535 = pneg %p289
        %p536 = pneg %p286
        %p537 = pneg %p310
        %p538 = pneg %p307
        %p539 = pneg %p331
        %p540 = pneg %p328
        %p541 = pneg %p352
        %p542 = pneg %p349
        %p543 = pneg %p373
        %p544 = pneg %p370
        %p545 = pneg %p399
        %p546 = pneg %p396
        %s547 = sand.u32 %s386, 1
        %s548 = scalar_lea.sflag [#allocation7], %s547
        %s549 = sand.u32 %s386, 1
        %s550 = smul.addr %s549, 8
        %s551 = scalar_lea.vmem [#allocation10], %s550
        %p552 = scmp.lt.s32.totalorder %s32, 1
        %s553 = scalar_select %p552, %s32, 1
        %s554 = smul.addr %s553, 8
        %s555 = scalar_lea.vmem %s0, %s554
        %p556 = scmp.lt.s32.totalorder %s32, 1
        %s557 = scalar_select %p556, %s32, 1
        %s558 = smul.addr %s557, 8
        %s559 = scalar_lea.vmem %s1, %s558
        %v561 = vld [vmem:[%s555] sm:$0xff]
        %v562 = vpack.c.bf16 %v561, %v561
        %v563 = vld [vmem:[%s4] sm:$0xf]
        %v564 = vld [vmem:[%s4 + $0x4] sm:$0xf]
        %v565 = vld [vmem:[%s4 + $0x8] sm:$0xf]
        %v566 = vld [vmem:[%s4 + $0xc] sm:$0xf]
        %v567 = vld [vmem:[#allocation5] sm:$0x1]
        %v569 = vlaneseq
        %v570 = vshrl.u32 %v569, 7
        %v571 = vsub.s32 0, %v570
        %v572 = vrot.slane %v567, %v571
        %v578 = vunpack.c.l.b16 %v563
        %v579 = vunpack.c.l.b16 %v564
        %v580 = vunpack.c.l.b16 %v565
        %v581 = vunpack.c.l.b16 %v566
        %v582 = vpack.c.b16 %v579, %v578
        %v583 = vpack.c.b16 %v581, %v580
        %vm586 = vcmask 261120
        %v588 = vsel %vm586, %v562, 0
        %590 = vmatprep.subr.bf16.mxu0 0
        %591 = vmatpush1.bf16.msra.mxu0 %v582
        %592 = vmatprep.subr.bf16.mxu0 0
        %593 = vmatpush1.bf16.msra.mxu0 %v583
        %594 = vmatprep.subr.bf16.mxu0 0
        %595 = vmatpush1.bf16.msra.mxu0 0
        %596 = vmatprep.subr.bf16.mxu0 0
        %597 = vmatpush1.bf16.msra.mxu0 0
        %598 = vmatprep.subr.bf16.mxu0 0
        %599 = vmatpush1.bf16.msra.mxu0 0
        %600 = vmatprep.subr.bf16.mxu0 0
        %601 = vmatpush1.bf16.msra.mxu0 0
        %602 = vmatprep.subr.bf16.mxu0 0
        %603 = vmatpush1.bf16.msra.mxu0 0
        %604 = vmatprep.subr.bf16.mxu0 0
        %605 = vmatpush1.bf16.msra.mxu0 0
        %606 = vmatprep.subr.bf16.mxu0 0
        %607 = vmatpush1.bf16.msra.mxu0 0
        %608 = vmatprep.subr.bf16.mxu0 0
        %609 = vmatpush1.bf16.msra.mxu0 0
        %610 = vmatprep.subr.bf16.mxu0 0
        %611 = vmatpush1.bf16.msra.mxu0 0
        %612 = vmatprep.subr.bf16.mxu0 0
        %613 = vmatpush1.bf16.msra.mxu0 0
        %614 = vmatprep.subr.bf16.mxu0 0
        %615 = vmatpush1.bf16.msra.mxu0 0
        %616 = vmatprep.subr.bf16.mxu0 0
        %617 = vmatpush1.bf16.msra.mxu0 0
        %618 = vmatprep.subr.bf16.mxu0 0
        %619 = vmatpush1.bf16.msra.mxu0 0
        %620 = vmatprep.subr.bf16.mxu0 0
        %621 = vmatpush1.bf16.msra.mxu0 0
        %622 = vmatprep.mubr.bf16.mxu0 0
        %623 = vmatmul.mubr.bf16.gmra.mrb[0].mxu0 %v588
        %v624 = vpop.f32.mrb[0].mxu0
        %v625 = vadd.f32 %v572, %v624
        %v626 = vpop.f32.mrb[0].mxu0
        %v627 = vpop.f32.mrb[0].mxu0
        %v628 = vpop.f32.mrb[0].mxu0
        %629 = vdwg.mxu0
        %v630 = vpack.c.bf16 %v625, %v625
        %vm631 = vcmask 781312
        %632 = vst.msk [vmem:[#allocation2] sm:$0xf] %vm631, %v630
        %v633 = vld [vmem:[%s2] sm:$0xf]
        %v634 = vld [vmem:[%s2 + $0x4] sm:$0xf]
        %v635 = vld [vmem:[%s2 + $0x8] sm:$0xf]
        %v636 = vld [vmem:[%s2 + $0xc] sm:$0xf]
        %v641 = vunpack.c.l.b16 %v633
        %v642 = vunpack.c.l.b16 %v634
        %v643 = vunpack.c.l.b16 %v635
        %v644 = vunpack.c.l.b16 %v636
        %v645 = vpack.c.b16 %v642, %v641
        %v646 = vpack.c.b16 %v644, %v643
        %v650 = vsel %vm586, %v630, 0
        %652 = vmatprep.subr.bf16.mxu0 0
        %653 = vmatpush1.bf16.msra.mxu0 %v645
        %654 = vmatprep.subr.bf16.mxu0 0
        %655 = vmatpush1.bf16.msra.mxu0 %v646
        %656 = vmatprep.subr.bf16.mxu0 0
        %657 = vmatpush1.bf16.msra.mxu0 0
        %658 = vmatprep.subr.bf16.mxu0 0
        %659 = vmatpush1.bf16.msra.mxu0 0
        %660 = vmatprep.subr.bf16.mxu0 0
        %661 = vmatpush1.bf16.msra.mxu0 0
        %662 = vmatprep.subr.bf16.mxu0 0
        %663 = vmatpush1.bf16.msra.mxu0 0
        %664 = vmatprep.subr.bf16.mxu0 0
        %665 = vmatpush1.bf16.msra.mxu0 0
        %666 = vmatprep.subr.bf16.mxu0 0
        %667 = vmatpush1.bf16.msra.mxu0 0
        %668 = vmatprep.subr.bf16.mxu0 0
        %669 = vmatpush1.bf16.msra.mxu0 0
        %670 = vmatprep.subr.bf16.mxu0 0
        %671 = vmatpush1.bf16.msra.mxu0 0
        %672 = vmatprep.subr.bf16.mxu0 0
        %673 = vmatpush1.bf16.msra.mxu0 0
        %674 = vmatprep.subr.bf16.mxu0 0
        %675 = vmatpush1.bf16.msra.mxu0 0
        %676 = vmatprep.subr.bf16.mxu0 0
        %677 = vmatpush1.bf16.msra.mxu0 0
        %678 = vmatprep.subr.bf16.mxu0 0
        %679 = vmatpush1.bf16.msra.mxu0 0
        %680 = vmatprep.subr.bf16.mxu0 0
        %681 = vmatpush1.bf16.msra.mxu0 0
        %682 = vmatprep.subr.bf16.mxu0 0
        %683 = vmatpush1.bf16.msra.mxu0 0
        %684 = vmatprep.mubr.bf16.mxu0 0
        %685 = vmatmul.mubr.bf16.gmra.mrb[0].mxu0 %v650
        %v686 = vpop.f32.mrb[0].mxu0
        %v687 = vadd.f32 0.0, %v686
        %v688 = vpop.f32.mrb[0].mxu0
        %v689 = vpop.f32.mrb[0].mxu0
        %v690 = vpop.f32.mrb[0].mxu0
        %691 = vdwg.mxu0
        %vm692 = vcmask 97280
        %693 = vst.msk [vmem:[#allocation3] sm:$0xff] %vm692, %v687
        %v694 = vld [vmem:[%s6] sm:$0xf]
        %v695 = vld [vmem:[%s6 + $0x4] sm:$0xf]
        %v696 = vld [vmem:[%s6 + $0x8] sm:$0xf]
        %v697 = vld [vmem:[%s6 + $0xc] sm:$0xf]
        %v698 = vld [vmem:[%s3] sm:$0x3]
        %v699 = vld [vmem:[%s559] sm:$0xff]
        %v700 = vld [vmem:[#allocation2] sm:$0xf]
        %v701 = vld [vmem:[#allocation3] sm:$0xff]
        %vm702 = vcmp.eq.s32.totalorder %v699, 0
        %704 = vset.pattern.permute.xlu0 0
        %705 = vperm.xlu0 %704, %v701
        %v706 = vpop.permute.xlu0 %705
        %v708 = vsel %vm702, %v706, 0.0
        %vm709 = vcmp.eq.s32.totalorder %v699, 1
        %710 = vset.pattern.permute.xlu0 1
        %711 = vperm.xlu0 %710, %v701
        %v712 = vpop.permute.xlu0 %711
        %v714 = vsel %vm709, %v712, %v708
        %vm715 = vcmp.eq.s32.totalorder %v699, 2
        %716 = vset.pattern.permute.xlu0 2
        %717 = vperm.xlu0 %716, %v701
        %v718 = vpop.permute.xlu0 %717
        %v720 = vsel %vm715, %v718, %v714
        %v722 = vunpack.c.l.b16 %v700
        %v723 = vpack.c.b16 %v722, %v722
        %724 = vrot.lane.b32.xlu0 %v723, 96
        %v725 = vpop.permute.xlu0 %724
        %vm726 = vcmask 64512
        %v728 = vsel %vm726, %v700, 0
        %v731 = vsel %vm726, %v725, 0
        %733 = vmatprep.subr.bf16.mxu0 0
        %734 = vmatpush1.bf16.xpose.msra.mxu0 %v731
        %735 = vmatprep.subr.bf16.mxu0 0
        %736 = vmatpush1.bf16.xpose.msra.mxu0 0
        %737 = vmatprep.subr.bf16.mxu0 0
        %738 = vmatpush1.bf16.xpose.msra.mxu0 0
        %739 = vmatprep.subr.bf16.mxu0 0
        %740 = vmatpush1.bf16.xpose.msra.mxu0 0
        %741 = vmatprep.subr.bf16.mxu0 0
        %742 = vmatpush1.bf16.xpose.msra.mxu0 0
        %743 = vmatprep.subr.bf16.mxu0 0
        %744 = vmatpush1.bf16.xpose.msra.mxu0 0
        %745 = vmatprep.subr.bf16.mxu0 0
        %746 = vmatpush1.bf16.xpose.msra.mxu0 0
        %747 = vmatprep.subr.bf16.mxu0 0
        %748 = vmatpush1.bf16.xpose.msra.mxu0 0
        %749 = vmatprep.subr.bf16.mxu0 0
        %750 = vmatpush1.bf16.xpose.msra.mxu0 0
        %751 = vmatprep.subr.bf16.mxu0 0
        %752 = vmatpush1.bf16.xpose.msra.mxu0 0
        %753 = vmatprep.subr.bf16.mxu0 0
        %754 = vmatpush1.bf16.xpose.msra.mxu0 0
        %755 = vmatprep.subr.bf16.mxu0 0
        %756 = vmatpush1.bf16.xpose.msra.mxu0 0
        %757 = vmatprep.subr.bf16.mxu0 0
        %758 = vmatpush1.bf16.xpose.msra.mxu0 0
        %759 = vmatprep.subr.bf16.mxu0 0
        %760 = vmatpush1.bf16.xpose.msra.mxu0 0
        %761 = vmatprep.subr.bf16.mxu0 0
        %762 = vmatpush1.bf16.xpose.msra.mxu0 0
        %763 = vmatprep.subr.bf16.mxu0 0
        %764 = vmatpush1.bf16.xpose.msra.mxu0 0
        %765 = vmatprep.mubr.bf16.mxu0 0
        %766 = vmatmul.mubr.bf16.gmra.mrb[0].mxu0 %v728
        %v767 = vpop.f32.mrb[0].mxu0
        %v768 = vadd.f32 %v720, %v767
        %v769 = vpop.f32.mrb[0].mxu0
        %v770 = vpop.f32.mrb[0].mxu0
        %v771 = vpop.f32.mrb[0].mxu0
        %772 = vdwg.mxu0
        %v773 = vsel %vm726, %v768, -inf
        %774 = vmax.xlane.f32.xlu0 %v773
        %v775 = vpop.xlane.xlu0 %774
        %v776 = vsub.f32 %v768, %v775
        %v777 = vmul.f32 %v776, 1.442695
        %v778 = vpow.pop %v777
        %v779 = vsel %vm726, %v778, 0.0
        %780 = vadd.xlane.f32.xlu0 %v779
        %v781 = vpop.xlane.xlu0 %780
        %v782 = vrcp.pop %v781
        %v783 = vmul.f32 %v778, %v782
        %v784 = vpack.c.bf16 %v783, %v783
        %v785 = vsel %vm702, %v783, 0.0
        %v786 = vsel %vm726, %v785, 0.0
        %787 = vadd.xlane.f32.xlu0 %v786
        %v788 = vpop.xlane.xlu0 %787
        %v789 = vsel %vm709, %v783, 0.0
        %v790 = vsel %vm726, %v789, 0.0
        %791 = vadd.xlane.f32.xlu0 %v790
        %v792 = vpop.xlane.xlu0 %791
        %v793 = vsel %vm715, %v783, 0.0
        %v794 = vsel %vm726, %v793, 0.0
        %795 = vadd.xlane.f32.xlu0 %v794
        %v796 = vpop.xlane.xlu0 %795
        %vm797 = vcmask 7168
        %v798 = vsel %vm797, %v788, %v792
        %vm799 = vcmask 15360
        %v800 = vsel %vm799, %v798, %v796
        %v801 = vpack.c.bf16 %v800, %v800
        %vm802 = vcmask 23552
        %v804 = vsel %vm802, %v801, 0
        %vm806 = vcmask 1040384
        %vm807 = vcmask 1041408
        %v808 = vsel %vm806, 4294967295, 65535
        %v809 = vsel %vm807, %v808, 0
        %v811 = vand.u32 %v698, %v809
        %813 = vmatprep.subr.bf16.mxu0 0
        %814 = vmatpush1.bf16.msra.mxu0 %v811
        %815 = vmatprep.subr.bf16.mxu0 0
        %816 = vmatpush1.bf16.msra.mxu0 0
        %817 = vmatprep.subr.bf16.mxu0 0
        %818 = vmatpush1.bf16.msra.mxu0 0
        %819 = vmatprep.subr.bf16.mxu0 0
        %820 = vmatpush1.bf16.msra.mxu0 0
        %821 = vmatprep.subr.bf16.mxu0 0
        %822 = vmatpush1.bf16.msra.mxu0 0
        %823 = vmatprep.subr.bf16.mxu0 0
        %824 = vmatpush1.bf16.msra.mxu0 0
        %825 = vmatprep.subr.bf16.mxu0 0
        %826 = vmatpush1.bf16.msra.mxu0 0
        %827 = vmatprep.subr.bf16.mxu0 0
        %828 = vmatpush1.bf16.msra.mxu0 0
        %829 = vmatprep.subr.bf16.mxu0 0
        %830 = vmatpush1.bf16.msra.mxu0 0
        %831 = vmatprep.subr.bf16.mxu0 0
        %832 = vmatpush1.bf16.msra.mxu0 0
        %833 = vmatprep.subr.bf16.mxu0 0
        %834 = vmatpush1.bf16.msra.mxu0 0
        %835 = vmatprep.subr.bf16.mxu0 0
        %836 = vmatpush1.bf16.msra.mxu0 0
        %837 = vmatprep.subr.bf16.mxu0 0
        %838 = vmatpush1.bf16.msra.mxu0 0
        %839 = vmatprep.subr.bf16.mxu0 0
        %840 = vmatpush1.bf16.msra.mxu0 0
        %841 = vmatprep.subr.bf16.mxu0 0
        %842 = vmatpush1.bf16.msra.mxu0 0
        %843 = vmatprep.subr.bf16.mxu0 0
        %844 = vmatpush1.bf16.msra.mxu0 0
        %845 = vmatprep.mubr.bf16.mxu0 0
        %846 = vmatmul.mubr.bf16.gmra.mrb[0].mxu0 %v804
        %v847 = vpop.f32.mrb[0].mxu0
        %v848 = vadd.f32 0.0, %v847
        %v849 = vpop.f32.mrb[0].mxu0
        %v850 = vpop.f32.mrb[0].mxu0
        %v851 = vpop.f32.mrb[0].mxu0
        %852 = vdwg.mxu0
        %853 = vrot.lane.b32.xlu0 %v723, 64
        %v854 = vpop.permute.xlu0 %853
        %v856 = vsel %vm726, %v784, 0
        %vm858 = vcmask 1043456
        %v860 = vsel %vm858, %v854, 0
        %862 = vmatprep.subr.bf16.mxu0 0
        %863 = vmatpush1.bf16.msra.mxu0 %v860
        %864 = vmatprep.subr.bf16.mxu0 0
        %865 = vmatpush1.bf16.msra.mxu0 0
        %866 = vmatprep.subr.bf16.mxu0 0
        %867 = vmatpush1.bf16.msra.mxu0 0
        %868 = vmatprep.subr.bf16.mxu0 0
        %869 = vmatpush1.bf16.msra.mxu0 0
        %870 = vmatprep.subr.bf16.mxu0 0
        %871 = vmatpush1.bf16.msra.mxu0 0
        %872 = vmatprep.subr.bf16.mxu0 0
        %873 = vmatpush1.bf16.msra.mxu0 0
        %874 = vmatprep.subr.bf16.mxu0 0
        %875 = vmatpush1.bf16.msra.mxu0 0
        %876 = vmatprep.subr.bf16.mxu0 0
        %877 = vmatpush1.bf16.msra.mxu0 0
        %878 = vmatprep.subr.bf16.mxu0 0
        %879 = vmatpush1.bf16.msra.mxu0 0
        %880 = vmatprep.subr.bf16.mxu0 0
        %881 = vmatpush1.bf16.msra.mxu0 0
        %882 = vmatprep.subr.bf16.mxu0 0
        %883 = vmatpush1.bf16.msra.mxu0 0
        %884 = vmatprep.subr.bf16.mxu0 0
        %885 = vmatpush1.bf16.msra.mxu0 0
        %886 = vmatprep.subr.bf16.mxu0 0
        %887 = vmatpush1.bf16.msra.mxu0 0
        %888 = vmatprep.subr.bf16.mxu0 0
        %889 = vmatpush1.bf16.msra.mxu0 0
        %890 = vmatprep.subr.bf16.mxu0 0
        %891 = vmatpush1.bf16.msra.mxu0 0
        %892 = vmatprep.subr.bf16.mxu0 0
        %893 = vmatpush1.bf16.msra.mxu0 0
        %894 = vmatprep.mubr.bf16.mxu0 0
        %895 = vmatmul.mubr.bf16.gmra.mrb[0].mxu0 %v856
        %v896 = vpop.f32.mrb[0].mxu0
        %v897 = vadd.f32 %v848, %v896
        %v898 = vpop.f32.mrb[0].mxu0
        %v899 = vpop.f32.mrb[0].mxu0
        %v900 = vpop.f32.mrb[0].mxu0
        %901 = vdwg.mxu0
        %v902 = vpack.c.bf16 %v897, %v897
        %903 = vset.pattern.permute.xlu0 3
        %904 = vperm.xlu0 %903, %v701
        %v905 = vpop.permute.xlu0 %904
        %v907 = vsel %vm702, %v905, 0.0
        %908 = vset.pattern.permute.xlu0 4
        %909 = vperm.xlu0 %908, %v701
        %v910 = vpop.permute.xlu0 %909
        %v912 = vsel %vm709, %v910, %v907
        %913 = vset.pattern.permute.xlu0 5
        %914 = vperm.xlu0 %913, %v701
        %v915 = vpop.permute.xlu0 %914
        %v917 = vsel %vm715, %v915, %v912
        %918 = vrot.lane.b32.xlu0 %v723, 120
        %v919 = vpop.permute.xlu0 %918
        %920 = vrot.lane.b32.xlu0 %v723, 88
        %v921 = vpop.permute.xlu0 %920
        %v923 = vsel %vm726, %v919, 0
        %v926 = vsel %vm726, %v921, 0
        %928 = vmatprep.subr.bf16.mxu0 0
        %929 = vmatpush1.bf16.xpose.msra.mxu0 %v926
        %930 = vmatprep.subr.bf16.mxu0 0
        %931 = vmatpush1.bf16.xpose.msra.mxu0 0
        %932 = vmatprep.subr.bf16.mxu0 0
        %933 = vmatpush1.bf16.xpose.msra.mxu0 0
        %934 = vmatprep.subr.bf16.mxu0 0
        %935 = vmatpush1.bf16.xpose.msra.mxu0 0
        %936 = vmatprep.subr.bf16.mxu0 0
        %937 = vmatpush1.bf16.xpose.msra.mxu0 0
        %938 = vmatprep.subr.bf16.mxu0 0
        %939 = vmatpush1.bf16.xpose.msra.mxu0 0
        %940 = vmatprep.subr.bf16.mxu0 0
        %941 = vmatpush1.bf16.xpose.msra.mxu0 0
        %942 = vmatprep.subr.bf16.mxu0 0
        %943 = vmatpush1.bf16.xpose.msra.mxu0 0
        %944 = vmatprep.subr.bf16.mxu0 0
        %945 = vmatpush1.bf16.xpose.msra.mxu0 0
        %946 = vmatprep.subr.bf16.mxu0 0
        %947 = vmatpush1.bf16.xpose.msra.mxu0 0
        %948 = vmatprep.subr.bf16.mxu0 0
        %949 = vmatpush1.bf16.xpose.msra.mxu0 0
        %950 = vmatprep.subr.bf16.mxu0 0
        %951 = vmatpush1.bf16.xpose.msra.mxu0 0
        %952 = vmatprep.subr.bf16.mxu0 0
        %953 = vmatpush1.bf16.xpose.msra.mxu0 0
        %954 = vmatprep.subr.bf16.mxu0 0
        %955 = vmatpush1.bf16.xpose.msra.mxu0 0
        %956 = vmatprep.subr.bf16.mxu0 0
        %957 = vmatpush1.bf16.xpose.msra.mxu0 0
        %958 = vmatprep.subr.bf16.mxu0 0
        %959 = vmatpush1.bf16.xpose.msra.mxu0 0
        %960 = vmatprep.mubr.bf16.mxu0 0
        %961 = vmatmul.mubr.bf16.gmra.mrb[0].mxu0 %v923
        %v962 = vpop.f32.mrb[0].mxu0
        %v963 = vadd.f32 %v917, %v962
        %v964 = vpop.f32.mrb[0].mxu0
        %v965 = vpop.f32.mrb[0].mxu0
        %v966 = vpop.f32.mrb[0].mxu0
        %967 = vdwg.mxu0
        %v968 = vsel %vm726, %v963, -inf
        %969 = vmax.xlane.f32.xlu0 %v968
        %v970 = vpop.xlane.xlu0 %969
        %v971 = vsub.f32 %v963, %v970
        %v972 = vmul.f32 %v971, 1.442695
        %v973 = vpow.pop %v972
        %v974 = vsel %vm726, %v973, 0.0
        %975 = vadd.xlane.f32.xlu0 %v974
        %v976 = vpop.xlane.xlu0 %975
        %v977 = vrcp.pop %v976
        %v978 = vmul.f32 %v973, %v977
        %v979 = vpack.c.bf16 %v978, %v978
        %v980 = vsel %vm702, %v978, 0.0
        %v981 = vsel %vm726, %v980, 0.0
        %982 = vadd.xlane.f32.xlu0 %v981
        %v983 = vpop.xlane.xlu0 %982
        %v984 = vsel %vm709, %v978, 0.0
        %v985 = vsel %vm726, %v984, 0.0
        %986 = vadd.xlane.f32.xlu0 %v985
        %v987 = vpop.xlane.xlu0 %986
        %v988 = vsel %vm715, %v978, 0.0
        %v989 = vsel %vm726, %v988, 0.0
        %990 = vadd.xlane.f32.xlu0 %v989
        %v991 = vpop.xlane.xlu0 %990
        %v992 = vsel %vm797, %v983, %v987
        %v993 = vsel %vm799, %v992, %v991
        %v994 = vpack.c.bf16 %v993, %v993
        %v996 = vsel %vm802, %v994, 0
        %998 = vmatprep.subr.bf16.mxu0 0
        %999 = vmatpush1.bf16.msra.mxu0 %v811
        %1000 = vmatprep.subr.bf16.mxu0 0
        %1001 = vmatpush1.bf16.msra.mxu0 0
        %1002 = vmatprep.subr.bf16.mxu0 0
        %1003 = vmatpush1.bf16.msra.mxu0 0
        %1004 = vmatprep.subr.bf16.mxu0 0
        %1005 = vmatpush1.bf16.msra.mxu0 0
        %1006 = vmatprep.subr.bf16.mxu0 0
        %1007 = vmatpush1.bf16.msra.mxu0 0
        %1008 = vmatprep.subr.bf16.mxu0 0
        %1009 = vmatpush1.bf16.msra.mxu0 0
        %1010 = vmatprep.subr.bf16.mxu0 0
        %1011 = vmatpush1.bf16.msra.mxu0 0
        %1012 = vmatprep.subr.bf16.mxu0 0
        %1013 = vmatpush1.bf16.msra.mxu0 0
        %1014 = vmatprep.subr.bf16.mxu0 0
        %1015 = vmatpush1.bf16.msra.mxu0 0
        %1016 = vmatprep.subr.bf16.mxu0 0
        %1017 = vmatpush1.bf16.msra.mxu0 0
        %1018 = vmatprep.subr.bf16.mxu0 0
        %1019 = vmatpush1.bf16.msra.mxu0 0
        %1020 = vmatprep.subr.bf16.mxu0 0
        %1021 = vmatpush1.bf16.msra.mxu0 0
        %1022 = vmatprep.subr.bf16.mxu0 0
        %1023 = vmatpush1.bf16.msra.mxu0 0
        %1024 = vmatprep.subr.bf16.mxu0 0
        %1025 = vmatpush1.bf16.msra.mxu0 0
        %1026 = vmatprep.subr.bf16.mxu0 0
        %1027 = vmatpush1.bf16.msra.mxu0 0
        %1028 = vmatprep.subr.bf16.mxu0 0
        %1029 = vmatpush1.bf16.msra.mxu0 0
        %1030 = vmatprep.mubr.bf16.mxu0 0
        %1031 = vmatmul.mubr.bf16.gmra.mrb[0].mxu0 %v996
        %v1032 = vpop.f32.mrb[0].mxu0
        %v1033 = vadd.f32 0.0, %v1032
        %v1034 = vpop.f32.mrb[0].mxu0
        %v1035 = vpop.f32.mrb[0].mxu0
        %v1036 = vpop.f32.mrb[0].mxu0
        %1037 = vdwg.mxu0
        %1038 = vrot.lane.b32.xlu0 %v723, 56
        %v1039 = vpop.permute.xlu0 %1038
        %v1041 = vsel %vm726, %v979, 0
        %v1044 = vsel %vm858, %v1039, 0
        %1046 = vmatprep.subr.bf16.mxu0 0
        %1047 = vmatpush1.bf16.msra.mxu0 %v1044
        %1048 = vmatprep.subr.bf16.mxu0 0
        %1049 = vmatpush1.bf16.msra.mxu0 0
        %1050 = vmatprep.subr.bf16.mxu0 0
        %1051 = vmatpush1.bf16.msra.mxu0 0
        %1052 = vmatprep.subr.bf16.mxu0 0
        %1053 = vmatpush1.bf16.msra.mxu0 0
        %1054 = vmatprep.subr.bf16.mxu0 0
        %1055 = vmatpush1.bf16.msra.mxu0 0
        %1056 = vmatprep.subr.bf16.mxu0 0
        %1057 = vmatpush1.bf16.msra.mxu0 0
        %1058 = vmatprep.subr.bf16.mxu0 0
        %1059 = vmatpush1.bf16.msra.mxu0 0
        %1060 = vmatprep.subr.bf16.mxu0 0
        %1061 = vmatpush1.bf16.msra.mxu0 0
        %1062 = vmatprep.subr.bf16.mxu0 0
        %1063 = vmatpush1.bf16.msra.mxu0 0
        %1064 = vmatprep.subr.bf16.mxu0 0
        %1065 = vmatpush1.bf16.msra.mxu0 0
        %1066 = vmatprep.subr.bf16.mxu0 0
        %1067 = vmatpush1.bf16.msra.mxu0 0
        %1068 = vmatprep.subr.bf16.mxu0 0
        %1069 = vmatpush1.bf16.msra.mxu0 0
        %1070 = vmatprep.subr.bf16.mxu0 0
        %1071 = vmatpush1.bf16.msra.mxu0 0
        %1072 = vmatprep.subr.bf16.mxu0 0
        %1073 = vmatpush1.bf16.msra.mxu0 0
        %1074 = vmatprep.subr.bf16.mxu0 0
        %1075 = vmatpush1.bf16.msra.mxu0 0
        %1076 = vmatprep.subr.bf16.mxu0 0
        %1077 = vmatpush1.bf16.msra.mxu0 0
        %1078 = vmatprep.mubr.bf16.mxu0 0
        %1079 = vmatmul.mubr.bf16.gmra.mrb[0].mxu0 %v1041
        %v1080 = vpop.f32.mrb[0].mxu0
        %v1081 = vadd.f32 %v1033, %v1080
        %v1082 = vpop.f32.mrb[0].mxu0
        %v1083 = vpop.f32.mrb[0].mxu0
        %v1084 = vpop.f32.mrb[0].mxu0
        %1085 = vdwg.mxu0
        %v1086 = vpack.c.bf16 %v1081, %v1081
        %v1088 = vsel %vm726, %v1086, 0
        %v1091 = vsel %vm858, %v695, 0
        %1093 = vmatprep.subr.bf16.mxu0 0
        %1094 = vmatpush1.bf16.msra.mxu0 %v1091
        %1095 = vmatprep.subr.bf16.mxu0 0
        %1096 = vmatpush1.bf16.msra.mxu0 0
        %1097 = vmatprep.subr.bf16.mxu0 0
        %1098 = vmatpush1.bf16.msra.mxu0 0
        %1099 = vmatprep.subr.bf16.mxu0 0
        %1100 = vmatpush1.bf16.msra.mxu0 0
        %1101 = vmatprep.subr.bf16.mxu0 0
        %1102 = vmatpush1.bf16.msra.mxu0 0
        %1103 = vmatprep.subr.bf16.mxu0 0
        %1104 = vmatpush1.bf16.msra.mxu0 0
        %1105 = vmatprep.subr.bf16.mxu0 0
        %1106 = vmatpush1.bf16.msra.mxu0 0
        %1107 = vmatprep.subr.bf16.mxu0 0
        %1108 = vmatpush1.bf16.msra.mxu0 0
        %1109 = vmatprep.subr.bf16.mxu0 0
        %1110 = vmatpush1.bf16.msra.mxu0 0
        %1111 = vmatprep.subr.bf16.mxu0 0
        %1112 = vmatpush1.bf16.msra.mxu0 0
        %1113 = vmatprep.subr.bf16.mxu0 0
        %1114 = vmatpush1.bf16.msra.mxu0 0
        %1115 = vmatprep.subr.bf16.mxu0 0
        %1116 = vmatpush1.bf16.msra.mxu0 0
        %1117 = vmatprep.subr.bf16.mxu0 0
        %1118 = vmatpush1.bf16.msra.mxu0 0
        %1119 = vmatprep.subr.bf16.mxu0 0
        %1120 = vmatpush1.bf16.msra.mxu0 0
        %1121 = vmatprep.subr.bf16.mxu0 0
        %1122 = vmatpush1.bf16.msra.mxu0 0
        %1123 = vmatprep.subr.bf16.mxu0 0
        %1124 = vmatpush1.bf16.msra.mxu0 0
        %1125 = vmatprep.mubr.bf16.mxu0 0
        %1126 = vmatmul.mubr.bf16.gmra.mrb[0].mxu0 %v1088
        %v1127 = vpop.f32.mrb[0].mxu0
        %v1128 = vadd.f32 0.0, %v1127
        %v1129 = vpop.f32.mrb[0].mxu0
        %v1130 = vpop.f32.mrb[0].mxu0
        %v1131 = vpop.f32.mrb[0].mxu0
        %1132 = vdwg.mxu0
        %v1134 = vsel %vm726, %v902, 0
        %v1137 = vsel %vm858, %v694, 0
        %1139 = vmatprep.subr.bf16.mxu0 0
        %1140 = vmatpush1.bf16.msra.mxu0 %v1137
        %1141 = vmatprep.subr.bf16.mxu0 0
        %1142 = vmatpush1.bf16.msra.mxu0 0
        %1143 = vmatprep.subr.bf16.mxu0 0
        %1144 = vmatpush1.bf16.msra.mxu0 0
        %1145 = vmatprep.subr.bf16.mxu0 0
        %1146 = vmatpush1.bf16.msra.mxu0 0
        %1147 = vmatprep.subr.bf16.mxu0 0
        %1148 = vmatpush1.bf16.msra.mxu0 0
        %1149 = vmatprep.subr.bf16.mxu0 0
        %1150 = vmatpush1.bf16.msra.mxu0 0
        %1151 = vmatprep.subr.bf16.mxu0 0
        %1152 = vmatpush1.bf16.msra.mxu0 0
        %1153 = vmatprep.subr.bf16.mxu0 0
        %1154 = vmatpush1.bf16.msra.mxu0 0
        %1155 = vmatprep.subr.bf16.mxu0 0
        %1156 = vmatpush1.bf16.msra.mxu0 0
        %1157 = vmatprep.subr.bf16.mxu0 0
        %1158 = vmatpush1.bf16.msra.mxu0 0
        %1159 = vmatprep.subr.bf16.mxu0 0
        %1160 = vmatpush1.bf16.msra.mxu0 0
        %1161 = vmatprep.subr.bf16.mxu0 0
        %1162 = vmatpush1.bf16.msra.mxu0 0
        %1163 = vmatprep.subr.bf16.mxu0 0
        %1164 = vmatpush1.bf16.msra.mxu0 0
        %1165 = vmatprep.subr.bf16.mxu0 0
        %1166 = vmatpush1.bf16.msra.mxu0 0
        %1167 = vmatprep.subr.bf16.mxu0 0
        %1168 = vmatpush1.bf16.msra.mxu0 0
        %1169 = vmatprep.subr.bf16.mxu0 0
        %1170 = vmatpush1.bf16.msra.mxu0 0
        %1171 = vmatprep.mubr.bf16.mxu0 0
        %1172 = vmatmul.mubr.bf16.gmra.mrb[0].mxu0 %v1134
        %v1173 = vpop.f32.mrb[0].mxu0
        %v1174 = vadd.f32 %v1128, %v1173
        %v1175 = vpop.f32.mrb[0].mxu0
        %v1176 = vpop.f32.mrb[0].mxu0
        %v1177 = vpop.f32.mrb[0].mxu0
        %1178 = vdwg.mxu0
        %1179 = vset.pattern.permute.xlu0 6
        %1180 = vperm.xlu0 %1179, %v701
        %v1181 = vpop.permute.xlu0 %1180
        %v1183 = vsel %vm702, %v1181, 0.0
        %1184 = vset.pattern.permute.xlu0 7
        %1185 = vperm.xlu0 %1184, %v701
        %v1186 = vpop.permute.xlu0 %1185
        %v1188 = vsel %vm709, %v1186, %v1183
        %1189 = vset.pattern.permute.xlu0 8
        %1190 = vperm.xlu0 %1189, %v701
        %v1191 = vpop.permute.xlu0 %1190
        %v1193 = vsel %vm715, %v1191, %v1188
        %1194 = vrot.lane.b32.xlu0 %v723, 112
        %v1195 = vpop.permute.xlu0 %1194
        %1196 = vrot.lane.b32.xlu0 %v723, 80
        %v1197 = vpop.permute.xlu0 %1196
        %v1199 = vsel %vm726, %v1195, 0
        %v1202 = vsel %vm726, %v1197, 0
        %1204 = vmatprep.subr.bf16.mxu0 0
        %1205 = vmatpush1.bf16.xpose.msra.mxu0 %v1202
        %1206 = vmatprep.subr.bf16.mxu0 0
        %1207 = vmatpush1.bf16.xpose.msra.mxu0 0
        %1208 = vmatprep.subr.bf16.mxu0 0
        %1209 = vmatpush1.bf16.xpose.msra.mxu0 0
        %1210 = vmatprep.subr.bf16.mxu0 0
        %1211 = vmatpush1.bf16.xpose.msra.mxu0 0
        %1212 = vmatprep.subr.bf16.mxu0 0
        %1213 = vmatpush1.bf16.xpose.msra.mxu0 0
        %1214 = vmatprep.subr.bf16.mxu0 0
        %1215 = vmatpush1.bf16.xpose.msra.mxu0 0
        %1216 = vmatprep.subr.bf16.mxu0 0
        %1217 = vmatpush1.bf16.xpose.msra.mxu0 0
        %1218 = vmatprep.subr.bf16.mxu0 0
        %1219 = vmatpush1.bf16.xpose.msra.mxu0 0
        %1220 = vmatprep.subr.bf16.mxu0 0
        %1221 = vmatpush1.bf16.xpose.msra.mxu0 0
        %1222 = vmatprep.subr.bf16.mxu0 0
        %1223 = vmatpush1.bf16.xpose.msra.mxu0 0
        %1224 = vmatprep.subr.bf16.mxu0 0
        %1225 = vmatpush1.bf16.xpose.msra.mxu0 0
        %1226 = vmatprep.subr.bf16.mxu0 0
        %1227 = vmatpush1.bf16.xpose.msra.mxu0 0
        %1228 = vmatprep.subr.bf16.mxu0 0
        %1229 = vmatpush1.bf16.xpose.msra.mxu0 0
        %1230 = vmatprep.subr.bf16.mxu0 0
        %1231 = vmatpush1.bf16.xpose.msra.mxu0 0
        %1232 = vmatprep.subr.bf16.mxu0 0
        %1233 = vmatpush1.bf16.xpose.msra.mxu0 0
        %1234 = vmatprep.subr.bf16.mxu0 0
        %1235 = vmatpush1.bf16.xpose.msra.mxu0 0
        %1236 = vmatprep.mubr.bf16.mxu0 0
        %1237 = vmatmul.mubr.bf16.gmra.mrb[0].mxu0 %v1199
        %v1238 = vpop.f32.mrb[0].mxu0
        %v1239 = vadd.f32 %v1193, %v1238
        %v1240 = vpop.f32.mrb[0].mxu0
        %v1241 = vpop.f32.mrb[0].mxu0
        %v1242 = vpop.f32.mrb[0].mxu0
        %1243 = vdwg.mxu0
        %v1244 = vsel %vm726, %v1239, -inf
        %1245 = vmax.xlane.f32.xlu0 %v1244
        %v1246 = vpop.xlane.xlu0 %1245
        %v1247 = vsub.f32 %v1239, %v1246
        %v1248 = vmul.f32 %v1247, 1.442695
        %v1249 = vpow.pop %v1248
        %v1250 = vsel %vm726, %v1249, 0.0
        %1251 = vadd.xlane.f32.xlu0 %v1250
        %v1252 = vpop.xlane.xlu0 %1251
        %v1253 = vrcp.pop %v1252
        %v1254 = vmul.f32 %v1249, %v1253
        %v1255 = vpack.c.bf16 %v1254, %v1254
        %v1256 = vsel %vm702, %v1254, 0.0
        %v1257 = vsel %vm726, %v1256, 0.0
        %1258 = vadd.xlane.f32.xlu0 %v1257
        %v1259 = vpop.xlane.xlu0 %1258
        %v1260 = vsel %vm709, %v1254, 0.0
        %v1261 = vsel %vm726, %v1260, 0.0
        %1262 = vadd.xlane.f32.xlu0 %v1261
        %v1263 = vpop.xlane.xlu0 %1262
        %v1264 = vsel %vm715, %v1254, 0.0
        %v1265 = vsel %vm726, %v1264, 0.0
        %1266 = vadd.xlane.f32.xlu0 %v1265
        %v1267 = vpop.xlane.xlu0 %1266
        %v1268 = vsel %vm797, %v1259, %v1263
        %v1269 = vsel %vm799, %v1268, %v1267
        %v1270 = vpack.c.bf16 %v1269, %v1269
        %v1272 = vsel %vm802, %v1270, 0
        %1274 = vmatprep.subr.bf16.mxu0 0
        %1275 = vmatpush1.bf16.msra.mxu0 %v811
        %1276 = vmatprep.subr.bf16.mxu0 0
        %1277 = vmatpush1.bf16.msra.mxu0 0
        %1278 = vmatprep.subr.bf16.mxu0 0
        %1279 = vmatpush1.bf16.msra.mxu0 0
        %1280 = vmatprep.subr.bf16.mxu0 0
        %1281 = vmatpush1.bf16.msra.mxu0 0
        %1282 = vmatprep.subr.bf16.mxu0 0
        %1283 = vmatpush1.bf16.msra.mxu0 0
        %1284 = vmatprep.subr.bf16.mxu0 0
        %1285 = vmatpush1.bf16.msra.mxu0 0
        %1286 = vmatprep.subr.bf16.mxu0 0
        %1287 = vmatpush1.bf16.msra.mxu0 0
        %1288 = vmatprep.subr.bf16.mxu0 0
        %1289 = vmatpush1.bf16.msra.mxu0 0
        %1290 = vmatprep.subr.bf16.mxu0 0
        %1291 = vmatpush1.bf16.msra.mxu0 0
        %1292 = vmatprep.subr.bf16.mxu0 0
        %1293 = vmatpush1.bf16.msra.mxu0 0
        %1294 = vmatprep.subr.bf16.mxu0 0
        %1295 = vmatpush1.bf16.msra.mxu0 0
        %1296 = vmatprep.subr.bf16.mxu0 0
        %1297 = vmatpush1.bf16.msra.mxu0 0
        %1298 = vmatprep.subr.bf16.mxu0 0
        %1299 = vmatpush1.bf16.msra.mxu0 0
        %1300 = vmatprep.subr.bf16.mxu0 0
        %1301 = vmatpush1.bf16.msra.mxu0 0
        %1302 = vmatprep.subr.bf16.mxu0 0
        %1303 = vmatpush1.bf16.msra.mxu0 0
        %1304 = vmatprep.subr.bf16.mxu0 0
        %1305 = vmatpush1.bf16.msra.mxu0 0
        %1306 = vmatprep.mubr.bf16.mxu0 0
        %1307 = vmatmul.mubr.bf16.gmra.mrb[0].mxu0 %v1272
        %v1308 = vpop.f32.mrb[0].mxu0
        %v1309 = vadd.f32 0.0, %v1308
        %v1310 = vpop.f32.mrb[0].mxu0
        %v1311 = vpop.f32.mrb[0].mxu0
        %v1312 = vpop.f32.mrb[0].mxu0
        %1313 = vdwg.mxu0
        %1314 = vrot.lane.b32.xlu0 %v723, 48
        %v1315 = vpop.permute.xlu0 %1314
        %v1317 = vsel %vm726, %v1255, 0
        %v1320 = vsel %vm858, %v1315, 0
        %1322 = vmatprep.subr.bf16.mxu0 0
        %1323 = vmatpush1.bf16.msra.mxu0 %v1320
        %1324 = vmatprep.subr.bf16.mxu0 0
        %1325 = vmatpush1.bf16.msra.mxu0 0
        %1326 = vmatprep.subr.bf16.mxu0 0
        %1327 = vmatpush1.bf16.msra.mxu0 0
        %1328 = vmatprep.subr.bf16.mxu0 0
        %1329 = vmatpush1.bf16.msra.mxu0 0
        %1330 = vmatprep.subr.bf16.mxu0 0
        %1331 = vmatpush1.bf16.msra.mxu0 0
        %1332 = vmatprep.subr.bf16.mxu0 0
        %1333 = vmatpush1.bf16.msra.mxu0 0
        %1334 = vmatprep.subr.bf16.mxu0 0
        %1335 = vmatpush1.bf16.msra.mxu0 0
        %1336 = vmatprep.subr.bf16.mxu0 0
        %1337 = vmatpush1.bf16.msra.mxu0 0
        %1338 = vmatprep.subr.bf16.mxu0 0
        %1339 = vmatpush1.bf16.msra.mxu0 0
        %1340 = vmatprep.subr.bf16.mxu0 0
        %1341 = vmatpush1.bf16.msra.mxu0 0
        %1342 = vmatprep.subr.bf16.mxu0 0
        %1343 = vmatpush1.bf16.msra.mxu0 0
        %1344 = vmatprep.subr.bf16.mxu0 0
        %1345 = vmatpush1.bf16.msra.mxu0 0
        %1346 = vmatprep.subr.bf16.mxu0 0
        %1347 = vmatpush1.bf16.msra.mxu0 0
        %1348 = vmatprep.subr.bf16.mxu0 0
        %1349 = vmatpush1.bf16.msra.mxu0 0
        %1350 = vmatprep.subr.bf16.mxu0 0
        %1351 = vmatpush1.bf16.msra.mxu0 0
        %1352 = vmatprep.subr.bf16.mxu0 0
        %1353 = vmatpush1.bf16.msra.mxu0 0
        %1354 = vmatprep.mubr.bf16.mxu0 0
        %1355 = vmatmul.mubr.bf16.gmra.mrb[0].mxu0 %v1317
        %v1356 = vpop.f32.mrb[0].mxu0
        %v1357 = vadd.f32 %v1309, %v1356
        %v1358 = vpop.f32.mrb[0].mxu0
        %v1359 = vpop.f32.mrb[0].mxu0
        %v1360 = vpop.f32.mrb[0].mxu0
        %1361 = vdwg.mxu0
        %v1362 = vpack.c.bf16 %v1357, %v1357
        %v1364 = vsel %vm726, %v1362, 0
        %v1367 = vsel %vm858, %v696, 0
        %1369 = vmatprep.subr.bf16.mxu0 0
        %1370 = vmatpush1.bf16.msra.mxu0 %v1367
        %1371 = vmatprep.subr.bf16.mxu0 0
        %1372 = vmatpush1.bf16.msra.mxu0 0
        %1373 = vmatprep.subr.bf16.mxu0 0
        %1374 = vmatpush1.bf16.msra.mxu0 0
        %1375 = vmatprep.subr.bf16.mxu0 0
        %1376 = vmatpush1.bf16.msra.mxu0 0
        %1377 = vmatprep.subr.bf16.mxu0 0
        %1378 = vmatpush1.bf16.msra.mxu0 0
        %1379 = vmatprep.subr.bf16.mxu0 0
        %1380 = vmatpush1.bf16.msra.mxu0 0
        %1381 = vmatprep.subr.bf16.mxu0 0
        %1382 = vmatpush1.bf16.msra.mxu0 0
        %1383 = vmatprep.subr.bf16.mxu0 0
        %1384 = vmatpush1.bf16.msra.mxu0 0
        %1385 = vmatprep.subr.bf16.mxu0 0
        %1386 = vmatpush1.bf16.msra.mxu0 0
        %1387 = vmatprep.subr.bf16.mxu0 0
        %1388 = vmatpush1.bf16.msra.mxu0 0
        %1389 = vmatprep.subr.bf16.mxu0 0
        %1390 = vmatpush1.bf16.msra.mxu0 0
        %1391 = vmatprep.subr.bf16.mxu0 0
        %1392 = vmatpush1.bf16.msra.mxu0 0
        %1393 = vmatprep.subr.bf16.mxu0 0
        %1394 = vmatpush1.bf16.msra.mxu0 0
        %1395 = vmatprep.subr.bf16.mxu0 0
        %1396 = vmatpush1.bf16.msra.mxu0 0
        %1397 = vmatprep.subr.bf16.mxu0 0
        %1398 = vmatpush1.bf16.msra.mxu0 0
        %1399 = vmatprep.subr.bf16.mxu0 0
        %1400 = vmatpush1.bf16.msra.mxu0 0
        %1401 = vmatprep.mubr.bf16.mxu0 0
        %1402 = vmatmul.mubr.bf16.gmra.mrb[0].mxu0 %v1364
        %v1403 = vpop.f32.mrb[0].mxu0
        %v1404 = vadd.f32 0.0, %v1403
        %v1405 = vpop.f32.mrb[0].mxu0
        %v1406 = vpop.f32.mrb[0].mxu0
        %v1407 = vpop.f32.mrb[0].mxu0
        %1408 = vdwg.mxu0
        %v1409 = vadd.f32 %v1174, %v1404
        %1410 = vset.pattern.permute.xlu0 9
        %1411 = vperm.xlu0 %1410, %v701
        %v1412 = vpop.permute.xlu0 %1411
        %v1414 = vsel %vm702, %v1412, 0.0
        %1415 = vset.pattern.permute.xlu0 10
        %1416 = vperm.xlu0 %1415, %v701
        %v1417 = vpop.permute.xlu0 %1416
        %v1419 = vsel %vm709, %v1417, %v1414
        %1420 = vset.pattern.permute.xlu0 11
        %1421 = vperm.xlu0 %1420, %v701
        %v1422 = vpop.permute.xlu0 %1421
        %v1424 = vsel %vm715, %v1422, %v1419
        %1425 = vrot.lane.b32.xlu0 %v723, 104
        %v1426 = vpop.permute.xlu0 %1425
        %1427 = vrot.lane.b32.xlu0 %v723, 72
        %v1428 = vpop.permute.xlu0 %1427
        %v1430 = vsel %vm726, %v1426, 0
        %v1433 = vsel %vm726, %v1428, 0
        %1435 = vmatprep.subr.bf16.mxu0 0
        %1436 = vmatpush1.bf16.xpose.msra.mxu0 %v1433
        %1437 = vmatprep.subr.bf16.mxu0 0
        %1438 = vmatpush1.bf16.xpose.msra.mxu0 0
        %1439 = vmatprep.subr.bf16.mxu0 0
        %1440 = vmatpush1.bf16.xpose.msra.mxu0 0
        %1441 = vmatprep.subr.bf16.mxu0 0
        %1442 = vmatpush1.bf16.xpose.msra.mxu0 0
        %1443 = vmatprep.subr.bf16.mxu0 0
        %1444 = vmatpush1.bf16.xpose.msra.mxu0 0
        %1445 = vmatprep.subr.bf16.mxu0 0
        %1446 = vmatpush1.bf16.xpose.msra.mxu0 0
        %1447 = vmatprep.subr.bf16.mxu0 0
        %1448 = vmatpush1.bf16.xpose.msra.mxu0 0
        %1449 = vmatprep.subr.bf16.mxu0 0
        %1450 = vmatpush1.bf16.xpose.msra.mxu0 0
        %1451 = vmatprep.subr.bf16.mxu0 0
        %1452 = vmatpush1.bf16.xpose.msra.mxu0 0
        %1453 = vmatprep.subr.bf16.mxu0 0
        %1454 = vmatpush1.bf16.xpose.msra.mxu0 0
        %1455 = vmatprep.subr.bf16.mxu0 0
        %1456 = vmatpush1.bf16.xpose.msra.mxu0 0
        %1457 = vmatprep.subr.bf16.mxu0 0
        %1458 = vmatpush1.bf16.xpose.msra.mxu0 0
        %1459 = vmatprep.subr.bf16.mxu0 0
        %1460 = vmatpush1.bf16.xpose.msra.mxu0 0
        %1461 = vmatprep.subr.bf16.mxu0 0
        %1462 = vmatpush1.bf16.xpose.msra.mxu0 0
        %1463 = vmatprep.subr.bf16.mxu0 0
        %1464 = vmatpush1.bf16.xpose.msra.mxu0 0
        %1465 = vmatprep.subr.bf16.mxu0 0
        %1466 = vmatpush1.bf16.xpose.msra.mxu0 0
        %1467 = vmatprep.mubr.bf16.mxu0 0
        %1468 = vmatmul.mubr.bf16.gmra.mrb[0].mxu0 %v1430
        %v1469 = vpop.f32.mrb[0].mxu0
        %v1470 = vadd.f32 %v1424, %v1469
        %v1471 = vpop.f32.mrb[0].mxu0
        %v1472 = vpop.f32.mrb[0].mxu0
        %v1473 = vpop.f32.mrb[0].mxu0
        %1474 = vdwg.mxu0
        %v1475 = vsel %vm726, %v1470, -inf
        %1476 = vmax.xlane.f32.xlu0 %v1475
        %v1477 = vpop.xlane.xlu0 %1476
        %v1478 = vsub.f32 %v1470, %v1477
        %v1479 = vmul.f32 %v1478, 1.442695
        %v1480 = vpow.pop %v1479
        %v1481 = vsel %vm726, %v1480, 0.0
        %1482 = vadd.xlane.f32.xlu0 %v1481
        %v1483 = vpop.xlane.xlu0 %1482
        %v1484 = vrcp.pop %v1483
        %v1485 = vmul.f32 %v1480, %v1484
        %v1486 = vpack.c.bf16 %v1485, %v1485
        %v1487 = vsel %vm702, %v1485, 0.0
        %v1488 = vsel %vm726, %v1487, 0.0
        %1489 = vadd.xlane.f32.xlu0 %v1488
        %v1490 = vpop.xlane.xlu0 %1489
        %v1491 = vsel %vm709, %v1485, 0.0
        %v1492 = vsel %vm726, %v1491, 0.0
        %1493 = vadd.xlane.f32.xlu0 %v1492
        %v1494 = vpop.xlane.xlu0 %1493
        %v1495 = vsel %vm715, %v1485, 0.0
        %v1496 = vsel %vm726, %v1495, 0.0
        %1497 = vadd.xlane.f32.xlu0 %v1496
        %v1498 = vpop.xlane.xlu0 %1497
        %v1499 = vsel %vm797, %v1490, %v1494
        %v1500 = vsel %vm799, %v1499, %v1498
        %v1501 = vpack.c.bf16 %v1500, %v1500
        %v1503 = vsel %vm802, %v1501, 0
        %1505 = vmatprep.subr.bf16.mxu0 0
        %1506 = vmatpush1.bf16.msra.mxu0 %v811
        %1507 = vmatprep.subr.bf16.mxu0 0
        %1508 = vmatpush1.bf16.msra.mxu0 0
        %1509 = vmatprep.subr.bf16.mxu0 0
        %1510 = vmatpush1.bf16.msra.mxu0 0
        %1511 = vmatprep.subr.bf16.mxu0 0
        %1512 = vmatpush1.bf16.msra.mxu0 0
        %1513 = vmatprep.subr.bf16.mxu0 0
        %1514 = vmatpush1.bf16.msra.mxu0 0
        %1515 = vmatprep.subr.bf16.mxu0 0
        %1516 = vmatpush1.bf16.msra.mxu0 0
        %1517 = vmatprep.subr.bf16.mxu0 0
        %1518 = vmatpush1.bf16.msra.mxu0 0
        %1519 = vmatprep.subr.bf16.mxu0 0
        %1520 = vmatpush1.bf16.msra.mxu0 0
        %1521 = vmatprep.subr.bf16.mxu0 0
        %1522 = vmatpush1.bf16.msra.mxu0 0
        %1523 = vmatprep.subr.bf16.mxu0 0
        %1524 = vmatpush1.bf16.msra.mxu0 0
        %1525 = vmatprep.subr.bf16.mxu0 0
        %1526 = vmatpush1.bf16.msra.mxu0 0
        %1527 = vmatprep.subr.bf16.mxu0 0
        %1528 = vmatpush1.bf16.msra.mxu0 0
        %1529 = vmatprep.subr.bf16.mxu0 0
        %1530 = vmatpush1.bf16.msra.mxu0 0
        %1531 = vmatprep.subr.bf16.mxu0 0
        %1532 = vmatpush1.bf16.msra.mxu0 0
        %1533 = vmatprep.subr.bf16.mxu0 0
        %1534 = vmatpush1.bf16.msra.mxu0 0
        %1535 = vmatprep.subr.bf16.mxu0 0
        %1536 = vmatpush1.bf16.msra.mxu0 0
        %1537 = vmatprep.mubr.bf16.mxu0 0
        %1538 = vmatmul.mubr.bf16.gmra.mrb[0].mxu0 %v1503
        %v1539 = vpop.f32.mrb[0].mxu0
        %v1540 = vadd.f32 0.0, %v1539
        %v1541 = vpop.f32.mrb[0].mxu0
        %v1542 = vpop.f32.mrb[0].mxu0
        %v1543 = vpop.f32.mrb[0].mxu0
        %1544 = vdwg.mxu0
        %1545 = vrot.lane.b32.xlu0 %v723, 40
        %v1546 = vpop.permute.xlu0 %1545
        %v1548 = vsel %vm726, %v1486, 0
        %v1551 = vsel %vm858, %v1546, 0
        %1553 = vmatprep.subr.bf16.mxu0 0
        %1554 = vmatpush1.bf16.msra.mxu0 %v1551
        %1555 = vmatprep.subr.bf16.mxu0 0
        %1556 = vmatpush1.bf16.msra.mxu0 0
        %1557 = vmatprep.subr.bf16.mxu0 0
        %1558 = vmatpush1.bf16.msra.mxu0 0
        %1559 = vmatprep.subr.bf16.mxu0 0
        %1560 = vmatpush1.bf16.msra.mxu0 0
        %1561 = vmatprep.subr.bf16.mxu0 0
        %1562 = vmatpush1.bf16.msra.mxu0 0
        %1563 = vmatprep.subr.bf16.mxu0 0
        %1564 = vmatpush1.bf16.msra.mxu0 0
        %1565 = vmatprep.subr.bf16.mxu0 0
        %1566 = vmatpush1.bf16.msra.mxu0 0
        %1567 = vmatprep.subr.bf16.mxu0 0
        %1568 = vmatpush1.bf16.msra.mxu0 0
        %1569 = vmatprep.subr.bf16.mxu0 0
        %1570 = vmatpush1.bf16.msra.mxu0 0
        %1571 = vmatprep.subr.bf16.mxu0 0
        %1572 = vmatpush1.bf16.msra.mxu0 0
        %1573 = vmatprep.subr.bf16.mxu0 0
        %1574 = vmatpush1.bf16.msra.mxu0 0
        %1575 = vmatprep.subr.bf16.mxu0 0
        %1576 = vmatpush1.bf16.msra.mxu0 0
        %1577 = vmatprep.subr.bf16.mxu0 0
        %1578 = vmatpush1.bf16.msra.mxu0 0
        %1579 = vmatprep.subr.bf16.mxu0 0
        %1580 = vmatpush1.bf16.msra.mxu0 0
        %1581 = vmatprep.subr.bf16.mxu0 0
        %1582 = vmatpush1.bf16.msra.mxu0 0
        %1583 = vmatprep.subr.bf16.mxu0 0
        %1584 = vmatpush1.bf16.msra.mxu0 0
        %1585 = vmatprep.mubr.bf16.mxu0 0
        %1586 = vmatmul.mubr.bf16.gmra.mrb[0].mxu0 %v1548
        %v1587 = vpop.f32.mrb[0].mxu0
        %v1588 = vadd.f32 %v1540, %v1587
        %v1589 = vpop.f32.mrb[0].mxu0
        %v1590 = vpop.f32.mrb[0].mxu0
        %v1591 = vpop.f32.mrb[0].mxu0
        %1592 = vdwg.mxu0
        %v1593 = vpack.c.bf16 %v1588, %v1588
        %v1595 = vsel %vm726, %v1593, 0
        %v1598 = vsel %vm858, %v697, 0
        %1600 = vmatprep.subr.bf16.mxu0 0
        %1601 = vmatpush1.bf16.msra.mxu0 %v1598
        %1602 = vmatprep.subr.bf16.mxu0 0
        %1603 = vmatpush1.bf16.msra.mxu0 0
        %1604 = vmatprep.subr.bf16.mxu0 0
        %1605 = vmatpush1.bf16.msra.mxu0 0
        %1606 = vmatprep.subr.bf16.mxu0 0
        %1607 = vmatpush1.bf16.msra.mxu0 0
        %1608 = vmatprep.subr.bf16.mxu0 0
        %1609 = vmatpush1.bf16.msra.mxu0 0
        %1610 = vmatprep.subr.bf16.mxu0 0
        %1611 = vmatpush1.bf16.msra.mxu0 0
        %1612 = vmatprep.subr.bf16.mxu0 0
        %1613 = vmatpush1.bf16.msra.mxu0 0
        %1614 = vmatprep.subr.bf16.mxu0 0
        %1615 = vmatpush1.bf16.msra.mxu0 0
        %1616 = vmatprep.subr.bf16.mxu0 0
        %1617 = vmatpush1.bf16.msra.mxu0 0
        %1618 = vmatprep.subr.bf16.mxu0 0
        %1619 = vmatpush1.bf16.msra.mxu0 0
        %1620 = vmatprep.subr.bf16.mxu0 0
        %1621 = vmatpush1.bf16.msra.mxu0 0
        %1622 = vmatprep.subr.bf16.mxu0 0
        %1623 = vmatpush1.bf16.msra.mxu0 0
        %1624 = vmatprep.subr.bf16.mxu0 0
        %1625 = vmatpush1.bf16.msra.mxu0 0
        %1626 = vmatprep.subr.bf16.mxu0 0
        %1627 = vmatpush1.bf16.msra.mxu0 0
        %1628 = vmatprep.subr.bf16.mxu0 0
        %1629 = vmatpush1.bf16.msra.mxu0 0
        %1630 = vmatprep.subr.bf16.mxu0 0
        %1631 = vmatpush1.bf16.msra.mxu0 0
        %1632 = vmatprep.mubr.bf16.mxu0 0
        %1633 = vmatmul.mubr.bf16.gmra.mrb[0].mxu0 %v1595
        %v1634 = vpop.f32.mrb[0].mxu0
        %v1635 = vadd.f32 0.0, %v1634
        %v1636 = vpop.f32.mrb[0].mxu0
        %v1637 = vpop.f32.mrb[0].mxu0
        %v1638 = vpop.f32.mrb[0].mxu0
        %1639 = vdwg.mxu0
        %v1640 = vadd.f32 %v1409, %v1635
        %1641 = vst.msk [vmem:[#allocation4] sm:$0xff] %vm586, %v1640
        %v1642 = vld [vmem:[#allocation4] sm:$0xff]
        %v1643 = vld [vmem:[#allocation8] sm:$0x1]
        %v1645 = vlaneseq
        %v1646 = vshrl.u32 %v1645, 7
        %v1647 = vsub.s32 0, %v1646
        %v1648 = vrot.slane %v1643, %v1647
        %v1650 = vadd.f32 %v1642, %v1648
        %v1651 = vadd.f32 %v561, %v1650
        %v1652 = vld [vmem:[%s8] sm:$0x1]
        %v1653 = vld [vmem:[%s9] sm:$0x1]
        %v1654 = vsel %vm586, %v1651, 0.0
        %1655 = vadd.xlane.f32.xlu0 %v1654
        %v1656 = vpop.xlane.xlu0 %1655
        %v1657 = vrcp.pop 32.0
        %v1658 = vmul.f32 %v1656, %v1657
        %v1659 = vsub.f32 %v1651, %v1658
        %v1660 = vmul.f32 %v1659, %v1659
        %v1661 = vsel %vm586, %v1660, 0.0
        %1662 = vadd.xlane.f32.xlu0 %v1661
        %v1663 = vpop.xlane.xlu0 %1662
        %v1664 = vmul.f32 %v1663, %v1657
        %v1665 = vadd.f32 %v1664, 1e-05
        %v1666 = vrsqrt.pop %v1665
        %v1667 = vmul.f32 %v1659, %v1666
        %v1669 = vlaneseq
        %v1670 = vshrl.u32 %v1669, 7
        %v1671 = vsub.s32 0, %v1670
        %v1672 = vrot.slane %v1652, %v1671
        %v1674 = vmul.f32 %v1667, %v1672
        %v1676 = vlaneseq
        %v1677 = vshrl.u32 %v1676, 7
        %v1678 = vsub.s32 0, %v1677
        %v1679 = vrot.slane %v1653, %v1678
        %v1681 = vadd.f32 %v1674, %v1679
        %v1682 = vpack.c.bf16 %v1681, %v1681
        %v1683 = vld [vmem:[%s10] sm:$0xf]
        %v1684 = vld [vmem:[%s10 + $0x4] sm:$0xf]
        %v1685 = vld [vmem:[%s10 + $0x8] sm:$0xf]
        %v1686 = vld [vmem:[%s10 + $0xc] sm:$0xf]
        %v1687 = vld [vmem:[%s11] sm:$0x1]
        %v1689 = vlaneseq
        %v1690 = vshrl.u32 %v1689, 7
        %v1691 = vsub.s32 0, %v1690
        %v1692 = vrot.slane %v1687, %v1691
        %v1698 = vunpack.c.l.b16 %v1683
        %v1699 = vunpack.c.l.b16 %v1684
        %v1700 = vunpack.c.l.b16 %v1685
        %v1701 = vunpack.c.l.b16 %v1686
        %v1702 = vpack.c.b16 %v1699, %v1698
        %v1703 = vpack.c.b16 %v1701, %v1700
        %v1707 = vsel %vm586, %v1682, 0
        %1709 = vmatprep.subr.bf16.mxu0 0
        %1710 = vmatpush1.bf16.msra.mxu0 %v1702
        %1711 = vmatprep.subr.bf16.mxu0 0
        %1712 = vmatpush1.bf16.msra.mxu0 %v1703
        %1713 = vmatprep.subr.bf16.mxu0 0
        %1714 = vmatpush1.bf16.msra.mxu0 0
        %1715 = vmatprep.subr.bf16.mxu0 0
        %1716 = vmatpush1.bf16.msra.mxu0 0
        %1717 = vmatprep.subr.bf16.mxu0 0
        %1718 = vmatpush1.bf16.msra.mxu0 0
        %1719 = vmatprep.subr.bf16.mxu0 0
        %1720 = vmatpush1.bf16.msra.mxu0 0
        %1721 = vmatprep.subr.bf16.mxu0 0
        %1722 = vmatpush1.bf16.msra.mxu0 0
        %1723 = vmatprep.subr.bf16.mxu0 0
        %1724 = vmatpush1.bf16.msra.mxu0 0
        %1725 = vmatprep.subr.bf16.mxu0 0
        %1726 = vmatpush1.bf16.msra.mxu0 0
        %1727 = vmatprep.subr.bf16.mxu0 0
        %1728 = vmatpush1.bf16.msra.mxu0 0
        %1729 = vmatprep.subr.bf16.mxu0 0
        %1730 = vmatpush1.bf16.msra.mxu0 0
        %1731 = vmatprep.subr.bf16.mxu0 0
        %1732 = vmatpush1.bf16.msra.mxu0 0
        %1733 = vmatprep.subr.bf16.mxu0 0
        %1734 = vmatpush1.bf16.msra.mxu0 0
        %1735 = vmatprep.subr.bf16.mxu0 0
        %1736 = vmatpush1.bf16.msra.mxu0 0
        %1737 = vmatprep.subr.bf16.mxu0 0
        %1738 = vmatpush1.bf16.msra.mxu0 0
        %1739 = vmatprep.subr.bf16.mxu0 0
        %1740 = vmatpush1.bf16.msra.mxu0 0
        %1741 = vmatprep.mubr.bf16.mxu0 0
        %1742 = vmatmul.mubr.bf16.gmra.mrb[0].mxu0 %v1707
        %v1743 = vpop.f32.mrb[0].mxu0
        %v1744 = vadd.f32 %v1692, %v1743
        %v1745 = vpop.f32.mrb[0].mxu0
        %v1746 = vpop.f32.mrb[0].mxu0
        %v1747 = vpop.f32.mrb[0].mxu0
        %1748 = vdwg.mxu0
        %v1749 = vmul.f32 %v1744, %v1744
        %v1750 = vmul.f32 %v1744, %v1749
        %v1751 = vmul.f32 %v1750, 0.044715
        %v1752 = vadd.f32 %v1744, %v1751
        %v1753 = vmul.f32 %v1752, 0.7978846
        %v1754 = vtanh.pop %v1753
        %v1755 = vadd.f32 %v1754, 1.0
        %v1756 = vmul.f32 %v1755, 0.5
        %v1757 = vmul.f32 %v1744, %v1756
        %v1758 = vpack.c.bf16 %v1757, %v1757
        %v1759 = vld [vmem:[%s12] sm:$0xf]
        %v1760 = vld [vmem:[%s12 + $0x4] sm:$0xf]
        %v1761 = vld [vmem:[%s12 + $0x8] sm:$0xf]
        %v1762 = vld [vmem:[%s12 + $0xc] sm:$0xf]
        %v1763 = vld [vmem:[%s12 + $0x10] sm:$0xf]
        %v1764 = vld [vmem:[%s12 + $0x14] sm:$0xf]
        %v1765 = vld [vmem:[%s12 + $0x18] sm:$0xf]
        %v1766 = vld [vmem:[%s12 + $0x1c] sm:$0xf]
        %v1767 = vld [vmem:[%s13] sm:$0x1]
        %v1769 = vlaneseq
        %v1770 = vshrl.u32 %v1769, 7
        %v1771 = vsub.s32 0, %v1770
        %v1772 = vrot.slane %v1767, %v1771
        %v1782 = vunpack.c.l.b16 %v1759
        %v1783 = vunpack.c.l.b16 %v1760
        %v1784 = vunpack.c.l.b16 %v1761
        %v1785 = vunpack.c.l.b16 %v1762
        %v1786 = vunpack.c.l.b16 %v1763
        %v1787 = vunpack.c.l.b16 %v1764
        %v1788 = vunpack.c.l.b16 %v1765
        %v1789 = vunpack.c.l.b16 %v1766
        %v1790 = vpack.c.b16 %v1783, %v1782
        %v1791 = vpack.c.b16 %v1785, %v1784
        %v1792 = vpack.c.b16 %v1787, %v1786
        %v1793 = vpack.c.b16 %v1789, %v1788
        %vm1798 = vcmask 523264
        %v1800 = vsel %vm1798, %v1758, 0
        %1802 = vmatprep.subr.bf16.mxu0 0
        %1803 = vmatpush1.bf16.msra.mxu0 %v1790
        %1804 = vmatprep.subr.bf16.mxu0 0
        %1805 = vmatpush1.bf16.msra.mxu0 %v1791
        %1806 = vmatprep.subr.bf16.mxu0 0
        %1807 = vmatpush1.bf16.msra.mxu0 %v1792
        %1808 = vmatprep.subr.bf16.mxu0 0
        %1809 = vmatpush1.bf16.msra.mxu0 %v1793
        %1810 = vmatprep.subr.bf16.mxu0 0
        %1811 = vmatpush1.bf16.msra.mxu0 0
        %1812 = vmatprep.subr.bf16.mxu0 0
        %1813 = vmatpush1.bf16.msra.mxu0 0
        %1814 = vmatprep.subr.bf16.mxu0 0
        %1815 = vmatpush1.bf16.msra.mxu0 0
        %1816 = vmatprep.subr.bf16.mxu0 0
        %1817 = vmatpush1.bf16.msra.mxu0 0
        %1818 = vmatprep.subr.bf16.mxu0 0
        %1819 = vmatpush1.bf16.msra.mxu0 0
        %1820 = vmatprep.subr.bf16.mxu0 0
        %1821 = vmatpush1.bf16.msra.mxu0 0
        %1822 = vmatprep.subr.bf16.mxu0 0
        %1823 = vmatpush1.bf16.msra.mxu0 0
        %1824 = vmatprep.subr.bf16.mxu0 0
        %1825 = vmatpush1.bf16.msra.mxu0 0
        %1826 = vmatprep.subr.bf16.mxu0 0
        %1827 = vmatpush1.bf16.msra.mxu0 0
        %1828 = vmatprep.subr.bf16.mxu0 0
        %1829 = vmatpush1.bf16.msra.mxu0 0
        %1830 = vmatprep.subr.bf16.mxu0 0
        %1831 = vmatpush1.bf16.msra.mxu0 0
        %1832 = vmatprep.subr.bf16.mxu0 0
        %1833 = vmatpush1.bf16.msra.mxu0 0
        %1834 = vmatprep.mubr.bf16.mxu0 0
        %1835 = vmatmul.mubr.bf16.gmra.mrb[0].mxu0 %v1800
        %v1836 = vpop.f32.mrb[0].mxu0
        %v1837 = vadd.f32 %v1772, %v1836
        %v1838 = vpop.f32.mrb[0].mxu0
        %v1839 = vpop.f32.mrb[0].mxu0
        %v1840 = vpop.f32.mrb[0].mxu0
        %1841 = vdwg.mxu0
        %v1842 = vadd.f32 %v1681, %v1837
        %v1843 = vld [vmem:[%s14] sm:$0x1]
        %v1844 = vld [vmem:[%s15] sm:$0x1]
        %v1845 = vsel %vm586, %v1842, 0.0
        %1846 = vadd.xlane.f32.xlu0 %v1845
        %v1847 = vpop.xlane.xlu0 %1846
        %v1848 = vmul.f32 %v1847, %v1657
        %v1849 = vsub.f32 %v1842, %v1848
        %v1850 = vmul.f32 %v1849, %v1849
        %v1851 = vsel %vm586, %v1850, 0.0
        %1852 = vadd.xlane.f32.xlu0 %v1851
        %v1853 = vpop.xlane.xlu0 %1852
        %v1854 = vmul.f32 %v1853, %v1657
        %v1855 = vadd.f32 %v1854, 1e-05
        %v1856 = vrsqrt.pop %v1855
        %v1857 = vmul.f32 %v1849, %v1856
        %v1859 = vlaneseq
        %v1860 = vshrl.u32 %v1859, 7
        %v1861 = vsub.s32 0, %v1860
        %v1862 = vrot.slane %v1843, %v1861
        %v1864 = vmul.f32 %v1857, %v1862
        %v1866 = vlaneseq
        %v1867 = vshrl.u32 %v1866, 7
        %v1868 = vsub.s32 0, %v1867
        %v1869 = vrot.slane %v1844, %v1868
        %v1871 = vadd.f32 %v1864, %v1869
        %1872 = vst.msk [vmem:[%s551] sm:$0xff] %vm586, %v1871
        %s1873 = sand.u32 %s386, 1
        %s1874 = scalar_lea.sflag [#allocation7], %s1873
        %s1875 = sand.u32 %s386, 1
        %s1876 = smul.addr %s1875, 8
        %s1877 = scalar_lea.vmem [#allocation10], %s1876
        // Predicated region
        $region93: #{tpu_custom_call.1} parent=83 // pred_check
          %p1878 = pneg %p396
        $region94: #{tpu_custom_call.1} parent=83 // pred_check_branch
          %1880 = sbr.rel (%p1878) target = $region96
        $region95: #{tpu_custom_call.1} parent=83 // pred_region
          %s1882 = ssub.s32 128, 128
          %1883 = vsyncadd %s1874, %s1882
          %s1884 = smul.addr %s32, 128
          %s1885 = scalar_lea.hbm %s16, %s1884
          %s1887 = sshll.u32 %s1877, 4
          %s1888 = int_to_ptr.vmem [resolvable:$true] %s1887
          %1890 = dma.vmem_to_hbm [thread:$0]  %s1888, 128, %s1885, %s1874
        $region96: #{tpu_custom_call.1} parent=83 // pred_fallthru
          _
      $region84: #{tpu_custom_call.1} parent=5 // pred_fallthru
        _
      %p1891 = scmp.le.s32.totalorder 2, %s27
      // Predicated region
      $region97: #{tpu_custom_call.1} parent=5 // pred_check
        %p1892 = pneg %p1891
      $region98: #{tpu_custom_call.1} parent=5 // pred_check_branch
        %1894 = sbr.rel (%p1892) target = $region100
      $region99: #{tpu_custom_call.1} parent=5 // pred_region
        %s1895 = ssub.s32 %s27, 2
        // Predicated region
        $region101: #{tpu_custom_call.1} parent=99 // pred_check
          %p1896 = pneg %p402
        $region102: #{tpu_custom_call.1} parent=99 // pred_check_branch
          %1898 = sbr.rel (%p1896) target = $region104
        $region103: #{tpu_custom_call.1} parent=99 // pred_region
          %s1899 = sand.u32 %s387, 1
          %s1900 = scalar_lea.sflag [#allocation7], %s1899
          %s1901 = sand.u32 %s387, 1
          %s1902 = smul.addr %s1901, 8
          %s1903 = scalar_lea.vmem [#allocation10], %s1902
          %1904 = dma.done %s1900, 128
        $region104: #{tpu_custom_call.1} parent=99 // pred_fallthru
          _
      $region100: #{tpu_custom_call.1} parent=5 // pred_fallthru
        _
    $region6: #{tpu_custom_call.1} parent=1 // loop_footer
      %s31 = sadd.s32 1, %s27
    $region7: #{tpu_custom_call.1} parent=1 // loop_footer_branch
      %26 = sbr.rel target = $region3
    $region8: #{tpu_custom_call.1} parent=1 // loop_exit
      _
    %1905 = vsyncpa [#allocation6], 1
    %s1906 = scalar_lea.sflag [#allocation6], 1
    %1907 = vsyncpa %s1906, 1
    %1908 = vsyncpa [#allocation9], 1
    %1909 = vsyncpa [#allocation7], 1
    %s1910 = scalar_lea.sflag [#allocation7], 1
    %1911 = vsyncpa %s1910, 1

</llo_original>
